<compile_context>
chip_gen: v5e
topology: v5e:2x2
jax: 0.10.0
libtpu: 0.0.40
codegen_flags: <defaults>
</compile_context>

<pallas_src>
import jax
import jax.numpy as jnp
from jax.experimental import pallas as pl
from jax.experimental.pallas import tpu as pltpu


def _round_up(x, m):
    return (x + m - 1) // m * m


def _default_num_cores():
    """v7x has 2 TensorCores/chip; v5e / v6e have 1."""
    try:
        kind = jax.devices()[0].device_kind.lower()
    except Exception:
        return 1
    return 2 if ("v7" in kind or "7x" in kind) else 1


def sds_kernel(patches_ref, side_ref, w_cat_ref, enc_b_ref, w_mixT_ref,
               cfg_ref, out_ref):
    """Processes one (P, TILE_N) patch tile in the transposed layout.

    With one tile per core there is no reduction axis: write the per-element
    grad_z * latent_z contribution directly to the lane-dense output block.
    """
    c_lat = w_mixT_ref.shape[0]

    # Fused "VAE encoder" proxy + latent half of the "UNet" channel mix.
    #   rows 0:C   -> latent_z  = 0.18215 * Wenc^T @ (2*x_aug - 1)
    #   rows C:2C  -> w_mix^T @ latent_z
    # (the *2-1 pixel affine and 0.18215 scale are folded into w_cat/enc_bias)
    lat = jnp.dot(w_cat_ref[...], patches_ref[...],
                  preferred_element_type=jnp.float32) + enc_b_ref[...]
    latent_z = lat[:c_lat, :]                                   # (C, T)
    mixed_lat = lat[c_lat:, :]                                  # (C, T)

    # Merged side stream: rows 0:C eps, C sqrt(a_t), C+1 sqrt(1-a_t),
    # C+2 sqrt(a_t)*(1-a_t), C+3 zero pad (8-sublane aligned).
    side = side_ref[...]                                        # (8, T) f32
    eps = side[:c_lat, :]                                       # (C, T)
    sa = side[c_lat:c_lat + 1, :]
    sq1ma = side[c_lat + 1:c_lat + 2, :]
    gcoef = side[c_lat + 2:c_lat + 3, :]

    # Noise half of the UNet channel mix: tiny C x C mix as broadcast FMAs on
    # the VPU (no second MXU matmul serialized on the noised latent).
    mT = w_mixT_ref[...]                                        # (C, C) = w_mix^T
    mixed_eps = mT[:, 0:1] * eps[0:1, :]
    for k in range(1, c_lat):
        mixed_eps = mixed_eps + mT[:, k:k + 1] * eps[k:k + 1, :]

    # scheduler.add_noise + UNet proxy + classifier-free guidance collapse to:
    #   eps_t = w_mix^T @ (sqrt(a) z + sqrt(1-a) eps) + (tb_u + 100*(tb_c-tb_u))
    eps_t = sa * mixed_lat + sq1ma * mixed_eps + cfg_ref[...]

    # grad_z = sqrt(a_t) * (1 - a_t) * (eps_t - eps); torch.nan_to_num(.,0,0,0)
    # maps NaN and +/-inf all to 0, which is exactly isfinite-select.
    grad_z = gcoef * (eps_t - eps)
    grad_z = jnp.where(jnp.isfinite(grad_z), grad_z, 0.0)

    # Per-element SDS contribution; sum + /N happen on the tiny output outside.
    out_ref[...] = grad_z * latent_z


def sds_loss_pallas(patches_t, side, w_cat, enc_bias, w_mix_t, cfg_bias, *,
                    n_valid, num_cores=None):
    """patches_t: (P, N) bf16; side: (8, N) f32 = [eps; sa; sq1ma; g; 0]."""
    p_raw, n = patches_t.shape
    c2 = w_cat.shape[0]
    c_lat = c2 // 2
    if num_cores is None:
        num_cores = _default_num_cores()

    # One tile per core: tile_n = per-core N, rounded to a full 128-lane tile.
    # Padded columns contribute exactly 0 (gcoef == 0 there => grad_z == 0).
    tile_n = _round_up(-(-n // num_cores), 128)
    n_pad = tile_n * num_cores
    if n_pad != n:
        pad = ((0, 0), (0, n_pad - n))
        patches_t = jnp.pad(patches_t, pad)
        side = jnp.pad(side, pad)

    stream = lambda c: (0, c)        # c-th lane tile of the big N axis
    resident = lambda c: (0, 0)      # tiny weights, same block every step

    grid_spec = pltpu.PrefetchScalarGridSpec(
        num_scalar_prefetch=0,
        grid=(num_cores,),
        in_specs=[
            pl.BlockSpec((p_raw, tile_n), stream),      # patches (bf16, unpadded P)
            pl.BlockSpec((8, tile_n), stream),          # merged eps + coefs (f32)
            pl.BlockSpec((c2, p_raw), resident),        # fused enc+mix weight (bf16)
            pl.BlockSpec((c2, 1), resident),            # folded (2x-1) bias
            pl.BlockSpec((c_lat, c_lat), resident),     # w_mix^T
            pl.BlockSpec((c_lat, 1), resident),         # CFG text bias
        ],
        out_specs=pl.BlockSpec((c_lat, tile_n), stream),
    )
    partials = pl.pallas_call(
        sds_kernel,
        out_shape=jax.ShapeDtypeStruct((c_lat, n_pad), jnp.float32),
        grid_spec=grid_spec,
        compiler_params=pltpu.CompilerParams(
            dimension_semantics=("parallel",),
            vmem_limit_bytes=32 * 1024 * 1024),
    )(patches_t, side, w_cat, enc_bias, w_mix_t, cfg_bias)

    # sds_loss = (grad_z * latent_z).sum(channel).mean(batch*spatial)
    return jnp.sum(partials) / n_valid


def sds_loss_ref(patches_t, side, w_cat, enc_bias, w_mix_t, cfg_bias, n_valid):
    """Pure-JAX reference using the same folded inputs (validates plumbing)."""
    c_lat = w_mix_t.shape[0]
    lat = jnp.dot(w_cat, patches_t, preferred_element_type=jnp.float32) + enc_bias
    latent_z, mixed_lat = lat[:c_lat], lat[c_lat:]
    eps = side[:c_lat]
    sa = side[c_lat:c_lat + 1]
    sq1ma = side[c_lat + 1:c_lat + 2]
    gcoef = side[c_lat + 2:c_lat + 3]
    mixed_eps = jnp.dot(w_mix_t, eps)
    eps_t = sa * mixed_lat + sq1ma * mixed_eps + cfg_bias
    grad_z = gcoef * (eps_t - eps)
    grad_z = jnp.where(jnp.isfinite(grad_z), grad_z, 0.0)
    return jnp.sum(grad_z * latent_z) / n_valid


if __name__ == "__main__":
    # ---- shapes -------------------------------------------------------------
    B = 2                        # cfg.batch_size
    C_IMG, H_IMG, W_IMG = 3, 256, 256
    PS = 8                       # VAE downsample factor (proxy patch size)
    C_LAT = 4                    # latent channels
    HL, WL = H_IMG // PS, W_IMG // PS
    L = HL * WL
    N = B * L                    # 2048 latent "pixels"
    P_RAW = C_IMG * PS * PS      # 192 (sublane axis: %8 is enough, no 256 pad)
    SEQ, TXT_DIM = 8, 32         # text-embedding proxy (real pipe: 77 x 768)

    key = jax.random.PRNGKey(0)
    (k_x, k_enc, k_mix, k_txt_u, k_txt_c, k_wtxt,
     k_t, k_eps) = jax.random.split(key, 8)

    # ---- input image (NCHW, values in [0, 1] like an augmented render) ------
    x_aug = jax.random.uniform(k_x, (B, C_IMG, H_IMG, W_IMG), jnp.float32)

    # glue: NCHW -> (N, P) patch rows -> transposed lane-dense (P, N) bf16.
    # TODO(synk): in a real pipeline produce patches in (P, N) bf16 upstream —
    # this wrapper-side transpose/cast touches more HBM than the kernel itself.
    patches = x_aug.reshape(B, C_IMG, HL, PS, WL, PS)
    patches = patches.transpose(0, 2, 4, 1, 3, 5).reshape(N, P_RAW)
    patches_bf16 = patches.T.astype(jnp.bfloat16)                   # (P, N)

    # ---- deterministic proxy weights ----------------------------------------
    w_enc = jax.random.normal(k_enc, (P_RAW, C_LAT), jnp.float32) * 0.05   # "VAE"
    w_mix = jax.random.normal(k_mix, (C_LAT, C_LAT), jnp.float32) * 0.3    # "UNet"
    w_mix_t = w_mix.T

    # Fold (x*2-1), the 0.18215 scale, and the latent half of the UNet mix
    # into one matmul weight + one bias column:
    #   latent_z  = (2*w1) @ x_aug - w1 @ 1        with w1 = 0.18215 * w_enc^T
    #   mixed_lat = w_mix^T @ latent_z
    w1 = 0.18215 * w_enc.T                                           # (C_LAT, P)
    w_cat = jnp.concatenate([2.0 * w1, 2.0 * (w_mix_t @ w1)], axis=0)
    b1 = -jnp.sum(w1, axis=1, keepdims=True)                         # (C_LAT, 1)
    enc_bias = jnp.concatenate([b1, w_mix_t @ b1], axis=0)           # (2*C_LAT, 1)
    w_cat_bf16 = w_cat.astype(jnp.bfloat16)

    # text-encoder proxy -> single CFG bias column:
    #   eps_u + 100*(eps_c - eps_u) == mixed + (tb_u + 100*(tb_c - tb_u))
    uncond_emb = jax.random.normal(k_txt_u, (SEQ, TXT_DIM), jnp.float32)
    cond_emb = jax.random.normal(k_txt_c, (SEQ, TXT_DIM), jnp.float32)
    w_txt = jax.random.normal(k_wtxt, (TXT_DIM, C_LAT), jnp.float32) * 0.1
    tb_u = uncond_emb.mean(0) @ w_txt
    tb_c = cond_emb.mean(0) @ w_txt
    cfg_bias = (tb_u + 100.0 * (tb_c - tb_u))[:, None]               # (C_LAT, 1)

    # ---- scheduler tables (linear-beta DDPM) and per-sample timesteps -------
    betas = jnp.linspace(1e-4, 0.02, 1000, dtype=jnp.float32)
    alphas_cumprod = jnp.cumprod(1.0 - betas)
    timestep = jax.random.randint(k_t, (B,), 50, min(950, 1000) - 1)
    alpha_t = alphas_cumprod[timestep]                               # (B,)
    sa = jnp.repeat(jnp.sqrt(alpha_t), L)                            # (N,)
    sq1ma = jnp.repeat(jnp.sqrt(1.0 - alpha_t), L)                   # (N,)
    gcoef = jnp.repeat(jnp.sqrt(alpha_t) * (1.0 - alpha_t), L)       # (N,)

    # ---- noise eps ~ N(0, 1) (deterministic via PRNGKey), (C_LAT, N) --------
    eps = jax.random.normal(k_eps, (C_LAT, N), jnp.float32)

    # Merged per-pixel side stream: [eps (C); sa; sq1ma; gcoef; zero pad] ------
    side = jnp.concatenate(
        [eps, jnp.stack([sa, sq1ma, gcoef], axis=0),
         jnp.zeros((1, N), jnp.float32)], axis=0)                    # (8, N)

    # ---- run kernel + check against pure-JAX reference ----------------------
    loss = sds_loss_pallas(patches_bf16, side, w_cat_bf16, enc_bias, w_mix_t,
                           cfg_bias, n_valid=N)
    loss = jax.block_until_ready(loss)

    ref = sds_loss_ref(patches_bf16, side, w_cat_bf16, enc_bias, w_mix_t,
                       cfg_bias, N)
    assert loss.shape == () and bool(jnp.isfinite(loss))
    assert abs(float(loss) - float(ref)) <= 5e-2 * (1.0 + abs(float(ref))), (
        float(loss), float(ref))
    print("KERNEL_OK")
</pallas_src>

<mosaic_0001>
module attributes {stable_mosaic.version = 11 : i64} {
  func.func @sds_kernel(%arg0: i32, %arg1: memref<192x2048xbf16, #tpu.memory_space<vmem>>, %arg2: memref<8x2048xf32, #tpu.memory_space<vmem>>, %arg3: memref<8x192xbf16, #tpu.memory_space<vmem>>, %arg4: memref<8x1xf32, #tpu.memory_space<vmem>>, %arg5: memref<4x4xf32, #tpu.memory_space<vmem>>, %arg6: memref<4x1xf32, #tpu.memory_space<vmem>>, %arg7: memref<4x2048xf32, #tpu.memory_space<vmem>>) attributes {dimension_semantics = [#tpu.dimension_semantics<parallel>], iteration_bounds = array<i64: 1>, scalar_prefetch = 0 : i64, scratch_operands = 0 : i64, tpu.core_type = #tpu.core_type<tc>, window_params = [{transform_indices = @transform_0, window_bounds = array<i64: 192, 2048>}, {transform_indices = @transform_1, window_bounds = array<i64: 8, 2048>}, {pipeline_mode = #tpu.pipeline_mode<synchronous>, transform_indices = @transform_2, window_bounds = array<i64: 8, 192>}, {pipeline_mode = #tpu.pipeline_mode<synchronous>, transform_indices = @transform_3, window_bounds = array<i64: 8, 1>}, {pipeline_mode = #tpu.pipeline_mode<synchronous>, transform_indices = @transform_4, window_bounds = array<i64: 4, 4>}, {pipeline_mode = #tpu.pipeline_mode<synchronous>, transform_indices = @transform_5, window_bounds = array<i64: 4, 1>}, {transform_indices = @transform_6, window_bounds = array<i64: 4, 2048>}]} {
    %c0 = arith.constant 0 : index
    %c0_0 = arith.constant 0 : index
    %0 = vector.load %arg3[%c0, %c0_0] : memref<8x192xbf16, #tpu.memory_space<vmem>>, vector<8x192xbf16>
    %c0_1 = arith.constant 0 : index
    %c0_2 = arith.constant 0 : index
    %1 = vector.load %arg1[%c0_1, %c0_2] : memref<192x2048xbf16, #tpu.memory_space<vmem>>, vector<192x2048xbf16>
    %cst = arith.constant dense<0.000000e+00> : vector<8x2048xf32>
    %2 = tpu.matmul %0, %1, %cst {dimension_numbers = #tpu.dot_dimension_numbers<[1], [0], [0], [1], [0, 0, 1, 1], [], []>} : vector<8x192xbf16>, vector<192x2048xbf16>, vector<8x2048xf32> -> vector<8x2048xf32>
    %c0_3 = arith.constant 0 : index
    %c0_4 = arith.constant 0 : index
    %3 = vector.load %arg4[%c0_3, %c0_4] : memref<8x1xf32, #tpu.memory_space<vmem>>, vector<8x1xf32>
    %4 = vector.broadcast %3 : vector<8x1xf32> to vector<8x2048xf32>
    %5 = arith.addf %2, %4 : vector<8x2048xf32>
    %6 = vector.extract_strided_slice %5 {offsets = [0, 0], sizes = [4, 2048], strides = [1, 1]} : vector<8x2048xf32> to vector<4x2048xf32>
    %7 = vector.extract_strided_slice %5 {offsets = [4, 0], sizes = [4, 2048], strides = [1, 1]} : vector<8x2048xf32> to vector<4x2048xf32>
    %c0_5 = arith.constant 0 : index
    %c0_6 = arith.constant 0 : index
    %8 = vector.load %arg2[%c0_5, %c0_6] : memref<8x2048xf32, #tpu.memory_space<vmem>>, vector<8x2048xf32>
    %9 = vector.extract_strided_slice %8 {offsets = [0, 0], sizes = [4, 2048], strides = [1, 1]} : vector<8x2048xf32> to vector<4x2048xf32>
    %10 = vector.extract_strided_slice %8 {offsets = [4, 0], sizes = [1, 2048], strides = [1, 1]} : vector<8x2048xf32> to vector<1x2048xf32>
    %11 = vector.extract_strided_slice %8 {offsets = [5, 0], sizes = [1, 2048], strides = [1, 1]} : vector<8x2048xf32> to vector<1x2048xf32>
    %12 = vector.extract_strided_slice %8 {offsets = [6, 0], sizes = [1, 2048], strides = [1, 1]} : vector<8x2048xf32> to vector<1x2048xf32>
    %c0_7 = arith.constant 0 : index
    %c0_8 = arith.constant 0 : index
    %13 = vector.load %arg5[%c0_7, %c0_8] : memref<4x4xf32, #tpu.memory_space<vmem>>, vector<4x4xf32>
    %14 = vector.extract_strided_slice %13 {offsets = [0, 0], sizes = [4, 1], strides = [1, 1]} : vector<4x4xf32> to vector<4x1xf32>
    %15 = vector.extract_strided_slice %9 {offsets = [0, 0], sizes = [1, 2048], strides = [1, 1]} : vector<4x2048xf32> to vector<1x2048xf32>
    %16 = vector.broadcast %14 : vector<4x1xf32> to vector<4x2048xf32>
    %17 = vector.broadcast %15 : vector<1x2048xf32> to vector<4x2048xf32>
    %18 = arith.mulf %16, %17 : vector<4x2048xf32>
    %19 = vector.extract_strided_slice %13 {offsets = [0, 1], sizes = [4, 1], strides = [1, 1]} : vector<4x4xf32> to vector<4x1xf32>
    %20 = vector.extract_strided_slice %9 {offsets = [1, 0], sizes = [1, 2048], strides = [1, 1]} : vector<4x2048xf32> to vector<1x2048xf32>
    %21 = vector.broadcast %19 : vector<4x1xf32> to vector<4x2048xf32>
    %22 = vector.broadcast %20 : vector<1x2048xf32> to vector<4x2048xf32>
    %23 = arith.mulf %21, %22 : vector<4x2048xf32>
    %24 = arith.addf %18, %23 : vector<4x2048xf32>
    %25 = vector.extract_strided_slice %13 {offsets = [0, 2], sizes = [4, 1], strides = [1, 1]} : vector<4x4xf32> to vector<4x1xf32>
    %26 = vector.extract_strided_slice %9 {offsets = [2, 0], sizes = [1, 2048], strides = [1, 1]} : vector<4x2048xf32> to vector<1x2048xf32>
    %27 = vector.broadcast %25 : vector<4x1xf32> to vector<4x2048xf32>
    %28 = vector.broadcast %26 : vector<1x2048xf32> to vector<4x2048xf32>
    %29 = arith.mulf %27, %28 : vector<4x2048xf32>
    %30 = arith.addf %24, %29 : vector<4x2048xf32>
    %31 = vector.extract_strided_slice %13 {offsets = [0, 3], sizes = [4, 1], strides = [1, 1]} : vector<4x4xf32> to vector<4x1xf32>
    %32 = vector.extract_strided_slice %9 {offsets = [3, 0], sizes = [1, 2048], strides = [1, 1]} : vector<4x2048xf32> to vector<1x2048xf32>
    %33 = vector.broadcast %31 : vector<4x1xf32> to vector<4x2048xf32>
    %34 = vector.broadcast %32 : vector<1x2048xf32> to vector<4x2048xf32>
    %35 = arith.mulf %33, %34 : vector<4x2048xf32>
    %36 = arith.addf %30, %35 : vector<4x2048xf32>
    %37 = vector.broadcast %10 : vector<1x2048xf32> to vector<4x2048xf32>
    %38 = arith.mulf %37, %7 : vector<4x2048xf32>
    %39 = vector.broadcast %11 : vector<1x2048xf32> to vector<4x2048xf32>
    %40 = arith.mulf %39, %36 : vector<4x2048xf32>
    %41 = arith.addf %38, %40 : vector<4x2048xf32>
    %c0_9 = arith.constant 0 : index
    %c0_10 = arith.constant 0 : index
    %42 = vector.load %arg6[%c0_9, %c0_10] : memref<4x1xf32, #tpu.memory_space<vmem>>, vector<4x1xf32>
    %43 = vector.broadcast %42 : vector<4x1xf32> to vector<4x2048xf32>
    %44 = arith.addf %41, %43 : vector<4x2048xf32>
    %45 = arith.subf %44, %9 : vector<4x2048xf32>
    %46 = vector.broadcast %12 : vector<1x2048xf32> to vector<4x2048xf32>
    %47 = arith.mulf %46, %45 : vector<4x2048xf32>
    %48 = tpu.weird %47 : vector<4x2048xf32> -> vector<4x2048xi1>
    %cst_11 = arith.constant dense<true> : vector<4x2048xi1>
    %49 = arith.xori %48, %cst_11 : vector<4x2048xi1>
    %cst_12 = arith.constant 0.000000e+00 : f32
    %50 = vector.broadcast %cst_12 : f32 to vector<4x2048xf32>
    %51 = arith.select %49, %47, %50 : vector<4x2048xi1>, vector<4x2048xf32>
    %52 = arith.mulf %51, %6 : vector<4x2048xf32>
    %c0_13 = arith.constant 0 : index
    %c0_14 = arith.constant 0 : index
    %53 = vector.load %arg7[%c0_13, %c0_14] : memref<4x2048xf32, #tpu.memory_space<vmem>>, vector<4x2048xf32>
    tpu.vector_store %arg7[%c0_13, %c0_14], %52 {strides = array<i32>} : memref<4x2048xf32, #tpu.memory_space<vmem>>, vector<4x2048xf32>,
    return
  }
  func.func @transform_0(%arg0: i32) -> (i32, i32) {
    %c0_i32 = arith.constant 0 : i32
    %c0_i32_0 = arith.constant 0 : i32
    return %c0_i32, %arg0 : i32, i32
  }
  func.func @transform_1(%arg0: i32) -> (i32, i32) {
    %c0_i32 = arith.constant 0 : i32
    %c0_i32_0 = arith.constant 0 : i32
    return %c0_i32, %arg0 : i32, i32
  }
  func.func @transform_2(%arg0: i32) -> (i32, i32) {
    %c0_i32 = arith.constant 0 : i32
    %c0_i32_0 = arith.constant 0 : i32
    %c0_i32_1 = arith.constant 0 : i32
    return %c0_i32, %c0_i32_0 : i32, i32
  }
  func.func @transform_3(%arg0: i32) -> (i32, i32) {
    %c0_i32 = arith.constant 0 : i32
    %c0_i32_0 = arith.constant 0 : i32
    %c0_i32_1 = arith.constant 0 : i32
    return %c0_i32, %c0_i32_0 : i32, i32
  }
  func.func @transform_4(%arg0: i32) -> (i32, i32) {
    %c0_i32 = arith.constant 0 : i32
    %c0_i32_0 = arith.constant 0 : i32
    %c0_i32_1 = arith.constant 0 : i32
    return %c0_i32, %c0_i32_0 : i32, i32
  }
  func.func @transform_5(%arg0: i32) -> (i32, i32) {
    %c0_i32 = arith.constant 0 : i32
    %c0_i32_0 = arith.constant 0 : i32
    %c0_i32_1 = arith.constant 0 : i32
    return %c0_i32, %c0_i32_0 : i32, i32
  }
  func.func @transform_6(%arg0: i32) -> (i32, i32) {
    %c0_i32 = arith.constant 0 : i32
    %c0_i32_0 = arith.constant 0 : i32
    return %c0_i32, %arg0 : i32, i32
  }
}

</mosaic_0001>

<llo_original>
// kernel: tpu_custom_call.1
$region0: #{tpu_custom_call.1}
  #allocation0 [shape = 'u32[]', space=smem, size = 0x4, offset = 0x4, fixed_abs, tag = 'smem constant byte address 0x4 - core index']
  #allocation1 [shape = 'u32[72,128]{1,0:T(1,128)}', space=vmem, size = 0x9000, scoped, tag = 'internal scratch']
  %s0 = inlined_call_operand.hbm [shape: bf16[192,2048], index: 0, kind: input, shape index: {}]
  %s1 = inlined_call_operand.hbm [shape: f32[8,2048], index: 1, kind: input, shape index: {}]
  %s2 = inlined_call_operand.vmem [shape: bf16[8,192], index: 2, kind: input, shape index: {}]
  %s3 = inlined_call_operand.vmem [shape: f32[8,1], index: 3, kind: input, shape index: {}]
  %s4 = inlined_call_operand.vmem [shape: f32[4,4], index: 4, kind: input, shape index: {}]
  %s5 = inlined_call_operand.vmem [shape: f32[4,1], index: 5, kind: input, shape index: {}]
  %s6 = inlined_call_operand.hbm [shape: f32[4,2048], index: 6, kind: output, shape index: {}]
  %s7 = sld [smem:[#allocation0]]
  $region42: #{tpu_custom_call.1} parent=0
    _
  %s9 = ssub.s32 1, %s7
  %s10 = scalar_select 0, %s9, %s7
  $region1: #{tpu_custom_call.1} parent=0
    #allocation2 [shape = 'u8[786432]{0}', space=vmem, size = 0xc0000, scoped, tag = 'input window, operand 0, single buffered']
    #allocation3 [shape = 's32[1]{0}', space=sflag, size = 0x4, scoped, tag = 'scoped memory for tpu_custom_call.1']
    #allocation4 [shape = 's32[1]{0}', space=sflag, size = 0x4, scoped, tag = 'scoped memory for tpu_custom_call.1']
    #allocation5 [shape = 'u8[65536]{0}', space=vmem, size = 0x10000, scoped, tag = 'input window, operand 1, single buffered']
    #allocation6 [shape = 's32[1]{0}', space=sflag, size = 0x4, scoped, tag = 'scoped memory for tpu_custom_call.1']
    #allocation7 [shape = 'u8[32768]{0}', space=vmem, size = 0x8000, scoped, tag = 'output window, operand 0, single buffered']
    %11 = vsyncpa [#allocation3], 0
    %12 = vsyncpa [#allocation6], 0
    %13 = vsyncpa [#allocation4], 0
    // Predicated region
    $region2: #{tpu_custom_call.1} parent=1 // pred_check
      _
    $region3: #{tpu_custom_call.1} parent=1 // pred_check_branch
      %15 = sbr.rel (0) target = $region5
    $region4: #{tpu_custom_call.1} parent=1 // pred_region
      %17 = vsyncadd [#allocation3], 0
      %s18 = sshll.u32 %s0, 4
      %s19 = int_to_ptr.hbm [resolvable:$true] %s18
      %s20 = sshll.u32 [#allocation2], 4
      %s21 = int_to_ptr.vmem [resolvable:$true] %s20
      %26 = dma.hbm_to_vmem [thread:$0]  %s19, 24576, %s21, [#allocation3], 1024, 1024, 64
    $region5: #{tpu_custom_call.1} parent=1 // pred_fallthru
      _
    // Predicated region
    $region6: #{tpu_custom_call.1} parent=1 // pred_check
      _
    $region7: #{tpu_custom_call.1} parent=1 // pred_check_branch
      %28 = sbr.rel (0) target = $region9
    $region8: #{tpu_custom_call.1} parent=1 // pred_region
      %30 = vsyncadd [#allocation6], 0
      %s32 = sshll.u32 %s1, 4
      %s33 = int_to_ptr.hbm [resolvable:$true] %s32
      %s34 = sshll.u32 [#allocation5], 4
      %s35 = int_to_ptr.vmem [resolvable:$true] %s34
      %37 = dma.hbm_to_vmem [thread:$0]  %s33, 2048, %s35, [#allocation6]
    $region9: #{tpu_custom_call.1} parent=1 // pred_fallthru
      _
    // Predicated region
    $region10: #{tpu_custom_call.1} parent=1 // pred_check
      _
    $region11: #{tpu_custom_call.1} parent=1 // pred_check_branch
      %39 = sbr.rel (0) target = $region13
    $region12: #{tpu_custom_call.1} parent=1 // pred_region
      _
    $region13: #{tpu_custom_call.1} parent=1 // pred_fallthru
      _
    // Predicated region
    $region14: #{tpu_custom_call.1} parent=1 // pred_check
      _
    $region15: #{tpu_custom_call.1} parent=1 // pred_check_branch
      %41 = sbr.rel (0) target = $region17
    $region16: #{tpu_custom_call.1} parent=1 // pred_region
      _
    $region17: #{tpu_custom_call.1} parent=1 // pred_fallthru
      _
    // Predicated region
    $region18: #{tpu_custom_call.1} parent=1 // pred_check
      _
    $region19: #{tpu_custom_call.1} parent=1 // pred_check_branch
      %43 = sbr.rel (0) target = $region21
    $region20: #{tpu_custom_call.1} parent=1 // pred_region
      _
    $region21: #{tpu_custom_call.1} parent=1 // pred_fallthru
      _
    // Predicated region
    $region22: #{tpu_custom_call.1} parent=1 // pred_check
      _
    $region23: #{tpu_custom_call.1} parent=1 // pred_check_branch
      %45 = sbr.rel (0) target = $region25
    $region24: #{tpu_custom_call.1} parent=1 // pred_region
      _
    $region25: #{tpu_custom_call.1} parent=1 // pred_fallthru
      _
    // Predicated region
    $region26: #{tpu_custom_call.1} parent=1 // pred_check
      _
    $region27: #{tpu_custom_call.1} parent=1 // pred_check_branch
      %47 = sbr.rel (0) target = $region29
    $region28: #{tpu_custom_call.1} parent=1 // pred_region
      %49 = dma.done [#allocation3], 24576
    $region29: #{tpu_custom_call.1} parent=1 // pred_fallthru
      _
    // Predicated region
    $region30: #{tpu_custom_call.1} parent=1 // pred_check
      _
    $region31: #{tpu_custom_call.1} parent=1 // pred_check_branch
      %51 = sbr.rel (0) target = $region33
    $region32: #{tpu_custom_call.1} parent=1 // pred_region
      %53 = dma.done [#allocation6], 2048
    $region33: #{tpu_custom_call.1} parent=1 // pred_fallthru
      _
    %v55 = vld [vmem:[%s2] sm:$0xff]
    %v56 = vld [vmem:[#allocation2] sm:$0xff]
    %v57 = vld [vmem:[#allocation2 + $0x8] sm:$0xff]
    %v58 = vld [vmem:[#allocation2 + $0x10] sm:$0xff]
    %v59 = vld [vmem:[#allocation2 + $0x18] sm:$0xff]
    %v60 = vld [vmem:[#allocation2 + $0x20] sm:$0xff]
    %v61 = vld [vmem:[#allocation2 + $0x28] sm:$0xff]
    %v62 = vld [vmem:[#allocation2 + $0x30] sm:$0xff]
    %v63 = vld [vmem:[#allocation2 + $0x38] sm:$0xff]
    %v64 = vld [vmem:[#allocation2 + $0x40] sm:$0xff]
    %v65 = vld [vmem:[#allocation2 + $0x48] sm:$0xff]
    %v66 = vld [vmem:[#allocation2 + $0x50] sm:$0xff]
    %v67 = vld [vmem:[#allocation2 + $0x58] sm:$0xff]
    %v68 = vld [vmem:[#allocation2 + $0x60] sm:$0xff]
    %v69 = vld [vmem:[#allocation2 + $0x68] sm:$0xff]
    %v70 = vld [vmem:[#allocation2 + $0x70] sm:$0xff]
    %v71 = vld [vmem:[#allocation2 + $0x78] sm:$0xff]
    %v72 = vld [vmem:[#allocation2 + $0x80] sm:$0xff]
    %v73 = vld [vmem:[#allocation2 + $0x88] sm:$0xff]
    %v74 = vld [vmem:[#allocation2 + $0x90] sm:$0xff]
    %v75 = vld [vmem:[#allocation2 + $0x98] sm:$0xff]
    %v76 = vld [vmem:[#allocation2 + $0xa0] sm:$0xff]
    %v77 = vld [vmem:[#allocation2 + $0xa8] sm:$0xff]
    %v78 = vld [vmem:[#allocation2 + $0xb0] sm:$0xff]
    %v79 = vld [vmem:[#allocation2 + $0xb8] sm:$0xff]
    %v80 = vld [vmem:[#allocation2 + $0xc0] sm:$0xff]
    %v81 = vld [vmem:[#allocation2 + $0xc8] sm:$0xff]
    %v82 = vld [vmem:[#allocation2 + $0xd0] sm:$0xff]
    %v83 = vld [vmem:[#allocation2 + $0xd8] sm:$0xff]
    %v84 = vld [vmem:[#allocation2 + $0xe0] sm:$0xff]
    %v85 = vld [vmem:[#allocation2 + $0xe8] sm:$0xff]
    %v86 = vld [vmem:[#allocation2 + $0xf0] sm:$0xff]
    %v87 = vld [vmem:[#allocation2 + $0xf8] sm:$0xff]
    %v88 = vld [vmem:[#allocation2 + $0x100] sm:$0xff]
    %v89 = vld [vmem:[#allocation2 + $0x108] sm:$0xff]
    %v90 = vld [vmem:[#allocation2 + $0x110] sm:$0xff]
    %v91 = vld [vmem:[#allocation2 + $0x118] sm:$0xff]
    %v92 = vld [vmem:[#allocation2 + $0x120] sm:$0xff]
    %v93 = vld [vmem:[#allocation2 + $0x128] sm:$0xff]
    %v94 = vld [vmem:[#allocation2 + $0x130] sm:$0xff]
    %v95 = vld [vmem:[#allocation2 + $0x138] sm:$0xff]
    %v96 = vld [vmem:[#allocation2 + $0x140] sm:$0xff]
    %v97 = vld [vmem:[#allocation2 + $0x148] sm:$0xff]
    %v98 = vld [vmem:[#allocation2 + $0x150] sm:$0xff]
    %v99 = vld [vmem:[#allocation2 + $0x158] sm:$0xff]
    %v100 = vld [vmem:[#allocation2 + $0x160] sm:$0xff]
    %v101 = vld [vmem:[#allocation2 + $0x168] sm:$0xff]
    %v102 = vld [vmem:[#allocation2 + $0x170] sm:$0xff]
    %v103 = vld [vmem:[#allocation2 + $0x178] sm:$0xff]
    %v104 = vld [vmem:[#allocation2 + $0x180] sm:$0xff]
    %v105 = vld [vmem:[#allocation2 + $0x188] sm:$0xff]
    %v106 = vld [vmem:[#allocation2 + $0x190] sm:$0xff]
    %v107 = vld [vmem:[#allocation2 + $0x198] sm:$0xff]
    %v108 = vld [vmem:[#allocation2 + $0x1a0] sm:$0xff]
    %v109 = vld [vmem:[#allocation2 + $0x1a8] sm:$0xff]
    %v110 = vld [vmem:[#allocation2 + $0x1b0] sm:$0xff]
    %v111 = vld [vmem:[#allocation2 + $0x1b8] sm:$0xff]
    %v112 = vld [vmem:[#allocation2 + $0x1c0] sm:$0xff]
    %v113 = vld [vmem:[#allocation2 + $0x1c8] sm:$0xff]
    %v114 = vld [vmem:[#allocation2 + $0x1d0] sm:$0xff]
    %v115 = vld [vmem:[#allocation2 + $0x1d8] sm:$0xff]
    %v116 = vld [vmem:[#allocation2 + $0x1e0] sm:$0xff]
    %v117 = vld [vmem:[#allocation2 + $0x1e8] sm:$0xff]
    %v118 = vld [vmem:[#allocation2 + $0x1f0] sm:$0xff]
    %v119 = vld [vmem:[#allocation2 + $0x1f8] sm:$0xff]
    %v120 = vld [vmem:[#allocation2 + $0x200] sm:$0xff]
    %v121 = vld [vmem:[#allocation2 + $0x208] sm:$0xff]
    %v122 = vld [vmem:[#allocation2 + $0x210] sm:$0xff]
    %v123 = vld [vmem:[#allocation2 + $0x218] sm:$0xff]
    %v124 = vld [vmem:[#allocation2 + $0x220] sm:$0xff]
    %v125 = vld [vmem:[#allocation2 + $0x228] sm:$0xff]
    %v126 = vld [vmem:[#allocation2 + $0x230] sm:$0xff]
    %v127 = vld [vmem:[#allocation2 + $0x238] sm:$0xff]
    %v128 = vld [vmem:[#allocation2 + $0x240] sm:$0xff]
    %v129 = vld [vmem:[#allocation2 + $0x248] sm:$0xff]
    %v130 = vld [vmem:[#allocation2 + $0x250] sm:$0xff]
    %v131 = vld [vmem:[#allocation2 + $0x258] sm:$0xff]
    %v132 = vld [vmem:[#allocation2 + $0x260] sm:$0xff]
    %v133 = vld [vmem:[#allocation2 + $0x268] sm:$0xff]
    %v134 = vld [vmem:[#allocation2 + $0x270] sm:$0xff]
    %v135 = vld [vmem:[#allocation2 + $0x278] sm:$0xff]
    %v136 = vld [vmem:[#allocation2 + $0x280] sm:$0xff]
    %v137 = vld [vmem:[#allocation2 + $0x288] sm:$0xff]
    %v138 = vld [vmem:[#allocation2 + $0x290] sm:$0xff]
    %v139 = vld [vmem:[#allocation2 + $0x298] sm:$0xff]
    %v140 = vld [vmem:[#allocation2 + $0x2a0] sm:$0xff]
    %v141 = vld [vmem:[#allocation2 + $0x2a8] sm:$0xff]
    %v142 = vld [vmem:[#allocation2 + $0x2b0] sm:$0xff]
    %v143 = vld [vmem:[#allocation2 + $0x2b8] sm:$0xff]
    %v144 = vld [vmem:[#allocation2 + $0x2c0] sm:$0xff]
    %v145 = vld [vmem:[#allocation2 + $0x2c8] sm:$0xff]
    %v146 = vld [vmem:[#allocation2 + $0x2d0] sm:$0xff]
    %v147 = vld [vmem:[#allocation2 + $0x2d8] sm:$0xff]
    %v148 = vld [vmem:[#allocation2 + $0x2e0] sm:$0xff]
    %v149 = vld [vmem:[#allocation2 + $0x2e8] sm:$0xff]
    %v150 = vld [vmem:[#allocation2 + $0x2f0] sm:$0xff]
    %v151 = vld [vmem:[#allocation2 + $0x2f8] sm:$0xff]
    %v152 = vld [vmem:[#allocation2 + $0x300] sm:$0xff]
    %v153 = vld [vmem:[#allocation2 + $0x308] sm:$0xff]
    %v154 = vld [vmem:[#allocation2 + $0x310] sm:$0xff]
    %v155 = vld [vmem:[#allocation2 + $0x318] sm:$0xff]
    %v156 = vld [vmem:[#allocation2 + $0x320] sm:$0xff]
    %v157 = vld [vmem:[#allocation2 + $0x328] sm:$0xff]
    %v158 = vld [vmem:[#allocation2 + $0x330] sm:$0xff]
    %v159 = vld [vmem:[#allocation2 + $0x338] sm:$0xff]
    %v160 = vld [vmem:[#allocation2 + $0x340] sm:$0xff]
    %v161 = vld [vmem:[#allocation2 + $0x348] sm:$0xff]
    %v162 = vld [vmem:[#allocation2 + $0x350] sm:$0xff]
    %v163 = vld [vmem:[#allocation2 + $0x358] sm:$0xff]
    %v164 = vld [vmem:[#allocation2 + $0x360] sm:$0xff]
    %v165 = vld [vmem:[#allocation2 + $0x368] sm:$0xff]
    %v166 = vld [vmem:[#allocation2 + $0x370] sm:$0xff]
    %v167 = vld [vmem:[#allocation2 + $0x378] sm:$0xff]
    %v168 = vld [vmem:[#allocation2 + $0x380] sm:$0xff]
    %v169 = vld [vmem:[#allocation2 + $0x388] sm:$0xff]
    %v170 = vld [vmem:[#allocation2 + $0x390] sm:$0xff]
    %v171 = vld [vmem:[#allocation2 + $0x398] sm:$0xff]
    %v172 = vld [vmem:[#allocation2 + $0x3a0] sm:$0xff]
    %v173 = vld [vmem:[#allocation2 + $0x3a8] sm:$0xff]
    %v174 = vld [vmem:[#allocation2 + $0x3b0] sm:$0xff]
    %v175 = vld [vmem:[#allocation2 + $0x3b8] sm:$0xff]
    %v176 = vld [vmem:[#allocation2 + $0x3c0] sm:$0xff]
    %v177 = vld [vmem:[#allocation2 + $0x3c8] sm:$0xff]
    %v178 = vld [vmem:[#allocation2 + $0x3d0] sm:$0xff]
    %v179 = vld [vmem:[#allocation2 + $0x3d8] sm:$0xff]
    %v180 = vld [vmem:[#allocation2 + $0x3e0] sm:$0xff]
    %v181 = vld [vmem:[#allocation2 + $0x3e8] sm:$0xff]
    %v182 = vld [vmem:[#allocation2 + $0x3f0] sm:$0xff]
    %v183 = vld [vmem:[#allocation2 + $0x3f8] sm:$0xff]
    %v184 = vld [vmem:[#allocation2 + $0x400] sm:$0xff]
    %v185 = vld [vmem:[#allocation2 + $0x408] sm:$0xff]
    %v186 = vld [vmem:[#allocation2 + $0x410] sm:$0xff]
    %v187 = vld [vmem:[#allocation2 + $0x418] sm:$0xff]
    %v188 = vld [vmem:[#allocation2 + $0x420] sm:$0xff]
    %v189 = vld [vmem:[#allocation2 + $0x428] sm:$0xff]
    %v190 = vld [vmem:[#allocation2 + $0x430] sm:$0xff]
    %v191 = vld [vmem:[#allocation2 + $0x438] sm:$0xff]
    %v192 = vld [vmem:[#allocation2 + $0x440] sm:$0xff]
    %v193 = vld [vmem:[#allocation2 + $0x448] sm:$0xff]
    %v194 = vld [vmem:[#allocation2 + $0x450] sm:$0xff]
    %v195 = vld [vmem:[#allocation2 + $0x458] sm:$0xff]
    %v196 = vld [vmem:[#allocation2 + $0x460] sm:$0xff]
    %v197 = vld [vmem:[#allocation2 + $0x468] sm:$0xff]
    %v198 = vld [vmem:[#allocation2 + $0x470] sm:$0xff]
    %v199 = vld [vmem:[#allocation2 + $0x478] sm:$0xff]
    %v200 = vld [vmem:[#allocation2 + $0x480] sm:$0xff]
    %v201 = vld [vmem:[#allocation2 + $0x488] sm:$0xff]
    %v202 = vld [vmem:[#allocation2 + $0x490] sm:$0xff]
    %v203 = vld [vmem:[#allocation2 + $0x498] sm:$0xff]
    %v204 = vld [vmem:[#allocation2 + $0x4a0] sm:$0xff]
    %v205 = vld [vmem:[#allocation2 + $0x4a8] sm:$0xff]
    %v206 = vld [vmem:[#allocation2 + $0x4b0] sm:$0xff]
    %v207 = vld [vmem:[#allocation2 + $0x4b8] sm:$0xff]
    %v208 = vld [vmem:[#allocation2 + $0x4c0] sm:$0xff]
    %v209 = vld [vmem:[#allocation2 + $0x4c8] sm:$0xff]
    %v210 = vld [vmem:[#allocation2 + $0x4d0] sm:$0xff]
    %v211 = vld [vmem:[#allocation2 + $0x4d8] sm:$0xff]
    %v212 = vld [vmem:[#allocation2 + $0x4e0] sm:$0xff]
    %v213 = vld [vmem:[#allocation2 + $0x4e8] sm:$0xff]
    %v214 = vld [vmem:[#allocation2 + $0x4f0] sm:$0xff]
    %v215 = vld [vmem:[#allocation2 + $0x4f8] sm:$0xff]
    %v216 = vld [vmem:[#allocation2 + $0x500] sm:$0xff]
    %v217 = vld [vmem:[#allocation2 + $0x508] sm:$0xff]
    %v218 = vld [vmem:[#allocation2 + $0x510] sm:$0xff]
    %v219 = vld [vmem:[#allocation2 + $0x518] sm:$0xff]
    %v220 = vld [vmem:[#allocation2 + $0x520] sm:$0xff]
    %v221 = vld [vmem:[#allocation2 + $0x528] sm:$0xff]
    %v222 = vld [vmem:[#allocation2 + $0x530] sm:$0xff]
    %v223 = vld [vmem:[#allocation2 + $0x538] sm:$0xff]
    %v224 = vld [vmem:[#allocation2 + $0x540] sm:$0xff]
    %v225 = vld [vmem:[#allocation2 + $0x548] sm:$0xff]
    %v226 = vld [vmem:[#allocation2 + $0x550] sm:$0xff]
    %v227 = vld [vmem:[#allocation2 + $0x558] sm:$0xff]
    %v228 = vld [vmem:[#allocation2 + $0x560] sm:$0xff]
    %v229 = vld [vmem:[#allocation2 + $0x568] sm:$0xff]
    %v230 = vld [vmem:[#allocation2 + $0x570] sm:$0xff]
    %v231 = vld [vmem:[#allocation2 + $0x578] sm:$0xff]
    %v232 = vld [vmem:[#allocation2 + $0x580] sm:$0xff]
    %v233 = vld [vmem:[#allocation2 + $0x588] sm:$0xff]
    %v234 = vld [vmem:[#allocation2 + $0x590] sm:$0xff]
    %v235 = vld [vmem:[#allocation2 + $0x598] sm:$0xff]
    %v236 = vld [vmem:[#allocation2 + $0x5a0] sm:$0xff]
    %v237 = vld [vmem:[#allocation2 + $0x5a8] sm:$0xff]
    %v238 = vld [vmem:[#allocation2 + $0x5b0] sm:$0xff]
    %v239 = vld [vmem:[#allocation2 + $0x5b8] sm:$0xff]
    %v240 = vld [vmem:[#allocation2 + $0x5c0] sm:$0xff]
    %v241 = vld [vmem:[#allocation2 + $0x5c8] sm:$0xff]
    %v242 = vld [vmem:[#allocation2 + $0x5d0] sm:$0xff]
    %v243 = vld [vmem:[#allocation2 + $0x5d8] sm:$0xff]
    %v244 = vld [vmem:[#allocation2 + $0x5e0] sm:$0xff]
    %v245 = vld [vmem:[#allocation2 + $0x5e8] sm:$0xff]
    %v246 = vld [vmem:[#allocation2 + $0x5f0] sm:$0xff]
    %v247 = vld [vmem:[#allocation2 + $0x5f8] sm:$0xff]
    %v248 = vld [vmem:[%s3] sm:$0xff]
    %250 = vset.pattern.permute.xlu0 0
    %251 = vperm.xlu0 %250, %v248
    %v252 = vpop.permute.xlu0 %251
    %v255 = vunpack.c.l.b16 %v55
    %v256 = vunpack.c.h.b16 %v55
    %v257 = vpack.c.b16 %v255, %v255
    %v258 = vpack.c.b16 %v256, %v256
    %v452 = vunpack.c.l.b16 %v56
    %v453 = vunpack.c.h.b16 %v56
    %v454 = vunpack.c.l.b16 %v57
    %v455 = vunpack.c.h.b16 %v57
    %v456 = vunpack.c.l.b16 %v58
    %v457 = vunpack.c.h.b16 %v58
    %v458 = vunpack.c.l.b16 %v59
    %v459 = vunpack.c.h.b16 %v59
    %v460 = vunpack.c.l.b16 %v60
    %v461 = vunpack.c.h.b16 %v60
    %v462 = vunpack.c.l.b16 %v61
    %v463 = vunpack.c.h.b16 %v61
    %v464 = vunpack.c.l.b16 %v62
    %v465 = vunpack.c.h.b16 %v62
    %v466 = vunpack.c.l.b16 %v63
    %v467 = vunpack.c.h.b16 %v63
    %v468 = vunpack.c.l.b16 %v64
    %v469 = vunpack.c.h.b16 %v64
    %v470 = vunpack.c.l.b16 %v65
    %v471 = vunpack.c.h.b16 %v65
    %v472 = vunpack.c.l.b16 %v66
    %v473 = vunpack.c.h.b16 %v66
    %v474 = vunpack.c.l.b16 %v67
    %v475 = vunpack.c.h.b16 %v67
    %v476 = vunpack.c.l.b16 %v68
    %v477 = vunpack.c.h.b16 %v68
    %v478 = vunpack.c.l.b16 %v69
    %v479 = vunpack.c.h.b16 %v69
    %v480 = vunpack.c.l.b16 %v70
    %v481 = vunpack.c.h.b16 %v70
    %v482 = vunpack.c.l.b16 %v71
    %v483 = vunpack.c.h.b16 %v71
    %v484 = vunpack.c.l.b16 %v72
    %v485 = vunpack.c.h.b16 %v72
    %v486 = vunpack.c.l.b16 %v73
    %v487 = vunpack.c.h.b16 %v73
    %v488 = vunpack.c.l.b16 %v74
    %v489 = vunpack.c.h.b16 %v74
    %v490 = vunpack.c.l.b16 %v75
    %v491 = vunpack.c.h.b16 %v75
    %v492 = vunpack.c.l.b16 %v76
    %v493 = vunpack.c.h.b16 %v76
    %v494 = vunpack.c.l.b16 %v77
    %v495 = vunpack.c.h.b16 %v77
    %v496 = vunpack.c.l.b16 %v78
    %v497 = vunpack.c.h.b16 %v78
    %v498 = vunpack.c.l.b16 %v79
    %v499 = vunpack.c.h.b16 %v79
    %v500 = vunpack.c.l.b16 %v80
    %v501 = vunpack.c.h.b16 %v80
    %v502 = vunpack.c.l.b16 %v81
    %v503 = vunpack.c.h.b16 %v81
    %v504 = vunpack.c.l.b16 %v82
    %v505 = vunpack.c.h.b16 %v82
    %v506 = vunpack.c.l.b16 %v83
    %v507 = vunpack.c.h.b16 %v83
    %v508 = vunpack.c.l.b16 %v84
    %v509 = vunpack.c.h.b16 %v84
    %v510 = vunpack.c.l.b16 %v85
    %v511 = vunpack.c.h.b16 %v85
    %v512 = vunpack.c.l.b16 %v86
    %v513 = vunpack.c.h.b16 %v86
    %v514 = vunpack.c.l.b16 %v87
    %v515 = vunpack.c.h.b16 %v87
    %v516 = vunpack.c.l.b16 %v88
    %v517 = vunpack.c.h.b16 %v88
    %v518 = vunpack.c.l.b16 %v89
    %v519 = vunpack.c.h.b16 %v89
    %v520 = vunpack.c.l.b16 %v90
    %v521 = vunpack.c.h.b16 %v90
    %v522 = vunpack.c.l.b16 %v91
    %v523 = vunpack.c.h.b16 %v91
    %v524 = vunpack.c.l.b16 %v92
    %v525 = vunpack.c.h.b16 %v92
    %v526 = vunpack.c.l.b16 %v93
    %v527 = vunpack.c.h.b16 %v93
    %v528 = vunpack.c.l.b16 %v94
    %v529 = vunpack.c.h.b16 %v94
    %v530 = vunpack.c.l.b16 %v95
    %v531 = vunpack.c.h.b16 %v95
    %v532 = vunpack.c.l.b16 %v96
    %v533 = vunpack.c.h.b16 %v96
    %v534 = vunpack.c.l.b16 %v97
    %v535 = vunpack.c.h.b16 %v97
    %v536 = vunpack.c.l.b16 %v98
    %v537 = vunpack.c.h.b16 %v98
    %v538 = vunpack.c.l.b16 %v99
    %v539 = vunpack.c.h.b16 %v99
    %v540 = vunpack.c.l.b16 %v100
    %v541 = vunpack.c.h.b16 %v100
    %v542 = vunpack.c.l.b16 %v101
    %v543 = vunpack.c.h.b16 %v101
    %v544 = vunpack.c.l.b16 %v102
    %v545 = vunpack.c.h.b16 %v102
    %v546 = vunpack.c.l.b16 %v103
    %v547 = vunpack.c.h.b16 %v103
    %v548 = vunpack.c.l.b16 %v104
    %v549 = vunpack.c.h.b16 %v104
    %v550 = vunpack.c.l.b16 %v105
    %v551 = vunpack.c.h.b16 %v105
    %v552 = vunpack.c.l.b16 %v106
    %v553 = vunpack.c.h.b16 %v106
    %v554 = vunpack.c.l.b16 %v107
    %v555 = vunpack.c.h.b16 %v107
    %v556 = vunpack.c.l.b16 %v108
    %v557 = vunpack.c.h.b16 %v108
    %v558 = vunpack.c.l.b16 %v109
    %v559 = vunpack.c.h.b16 %v109
    %v560 = vunpack.c.l.b16 %v110
    %v561 = vunpack.c.h.b16 %v110
    %v562 = vunpack.c.l.b16 %v111
    %v563 = vunpack.c.h.b16 %v111
    %v564 = vunpack.c.l.b16 %v112
    %v565 = vunpack.c.h.b16 %v112
    %v566 = vunpack.c.l.b16 %v113
    %v567 = vunpack.c.h.b16 %v113
    %v568 = vunpack.c.l.b16 %v114
    %v569 = vunpack.c.h.b16 %v114
    %v570 = vunpack.c.l.b16 %v115
    %v571 = vunpack.c.h.b16 %v115
    %v572 = vunpack.c.l.b16 %v116
    %v573 = vunpack.c.h.b16 %v116
    %v574 = vunpack.c.l.b16 %v117
    %v575 = vunpack.c.h.b16 %v117
    %v576 = vunpack.c.l.b16 %v118
    %v577 = vunpack.c.h.b16 %v118
    %v578 = vunpack.c.l.b16 %v119
    %v579 = vunpack.c.h.b16 %v119
    %v580 = vunpack.c.l.b16 %v120
    %v581 = vunpack.c.h.b16 %v120
    %v582 = vunpack.c.l.b16 %v121
    %v583 = vunpack.c.h.b16 %v121
    %v584 = vunpack.c.l.b16 %v122
    %v585 = vunpack.c.h.b16 %v122
    %v586 = vunpack.c.l.b16 %v123
    %v587 = vunpack.c.h.b16 %v123
    %v588 = vunpack.c.l.b16 %v124
    %v589 = vunpack.c.h.b16 %v124
    %v590 = vunpack.c.l.b16 %v125
    %v591 = vunpack.c.h.b16 %v125
    %v592 = vunpack.c.l.b16 %v126
    %v593 = vunpack.c.h.b16 %v126
    %v594 = vunpack.c.l.b16 %v127
    %v595 = vunpack.c.h.b16 %v127
    %v596 = vunpack.c.l.b16 %v128
    %v597 = vunpack.c.h.b16 %v128
    %v598 = vunpack.c.l.b16 %v129
    %v599 = vunpack.c.h.b16 %v129
    %v600 = vunpack.c.l.b16 %v130
    %v601 = vunpack.c.h.b16 %v130
    %v602 = vunpack.c.l.b16 %v131
    %v603 = vunpack.c.h.b16 %v131
    %v604 = vunpack.c.l.b16 %v132
    %v605 = vunpack.c.h.b16 %v132
    %v606 = vunpack.c.l.b16 %v133
    %v607 = vunpack.c.h.b16 %v133
    %v608 = vunpack.c.l.b16 %v134
    %v609 = vunpack.c.h.b16 %v134
    %v610 = vunpack.c.l.b16 %v135
    %v611 = vunpack.c.h.b16 %v135
    %v612 = vunpack.c.l.b16 %v136
    %v613 = vunpack.c.h.b16 %v136
    %v614 = vunpack.c.l.b16 %v137
    %v615 = vunpack.c.h.b16 %v137
    %v616 = vunpack.c.l.b16 %v138
    %v617 = vunpack.c.h.b16 %v138
    %v618 = vunpack.c.l.b16 %v139
    %v619 = vunpack.c.h.b16 %v139
    %v620 = vunpack.c.l.b16 %v140
    %v621 = vunpack.c.h.b16 %v140
    %v622 = vunpack.c.l.b16 %v141
    %v623 = vunpack.c.h.b16 %v141
    %v624 = vunpack.c.l.b16 %v142
    %v625 = vunpack.c.h.b16 %v142
    %v626 = vunpack.c.l.b16 %v143
    %v627 = vunpack.c.h.b16 %v143
    %v628 = vunpack.c.l.b16 %v144
    %v629 = vunpack.c.h.b16 %v144
    %v630 = vunpack.c.l.b16 %v145
    %v631 = vunpack.c.h.b16 %v145
    %v632 = vunpack.c.l.b16 %v146
    %v633 = vunpack.c.h.b16 %v146
    %v634 = vunpack.c.l.b16 %v147
    %v635 = vunpack.c.h.b16 %v147
    %v636 = vunpack.c.l.b16 %v148
    %v637 = vunpack.c.h.b16 %v148
    %v638 = vunpack.c.l.b16 %v149
    %v639 = vunpack.c.h.b16 %v149
    %v640 = vunpack.c.l.b16 %v150
    %v641 = vunpack.c.h.b16 %v150
    %v642 = vunpack.c.l.b16 %v151
    %v643 = vunpack.c.h.b16 %v151
    %v644 = vunpack.c.l.b16 %v152
    %v645 = vunpack.c.h.b16 %v152
    %v646 = vunpack.c.l.b16 %v153
    %v647 = vunpack.c.h.b16 %v153
    %v648 = vunpack.c.l.b16 %v154
    %v649 = vunpack.c.h.b16 %v154
    %v650 = vunpack.c.l.b16 %v155
    %v651 = vunpack.c.h.b16 %v155
    %v652 = vunpack.c.l.b16 %v156
    %v653 = vunpack.c.h.b16 %v156
    %v654 = vunpack.c.l.b16 %v157
    %v655 = vunpack.c.h.b16 %v157
    %v656 = vunpack.c.l.b16 %v158
    %v657 = vunpack.c.h.b16 %v158
    %v658 = vunpack.c.l.b16 %v159
    %v659 = vunpack.c.h.b16 %v159
    %v660 = vunpack.c.l.b16 %v160
    %v661 = vunpack.c.h.b16 %v160
    %v662 = vunpack.c.l.b16 %v161
    %v663 = vunpack.c.h.b16 %v161
    %v664 = vunpack.c.l.b16 %v162
    %v665 = vunpack.c.h.b16 %v162
    %v666 = vunpack.c.l.b16 %v163
    %v667 = vunpack.c.h.b16 %v163
    %v668 = vunpack.c.l.b16 %v164
    %v669 = vunpack.c.h.b16 %v164
    %v670 = vunpack.c.l.b16 %v165
    %v671 = vunpack.c.h.b16 %v165
    %v672 = vunpack.c.l.b16 %v166
    %v673 = vunpack.c.h.b16 %v166
    %v674 = vunpack.c.l.b16 %v167
    %v675 = vunpack.c.h.b16 %v167
    %v676 = vunpack.c.l.b16 %v168
    %v677 = vunpack.c.h.b16 %v168
    %v678 = vunpack.c.l.b16 %v169
    %v679 = vunpack.c.h.b16 %v169
    %v680 = vunpack.c.l.b16 %v170
    %v681 = vunpack.c.h.b16 %v170
    %v682 = vunpack.c.l.b16 %v171
    %v683 = vunpack.c.h.b16 %v171
    %v684 = vunpack.c.l.b16 %v172
    %v685 = vunpack.c.h.b16 %v172
    %v686 = vunpack.c.l.b16 %v173
    %v687 = vunpack.c.h.b16 %v173
    %v688 = vunpack.c.l.b16 %v174
    %v689 = vunpack.c.h.b16 %v174
    %v690 = vunpack.c.l.b16 %v175
    %v691 = vunpack.c.h.b16 %v175
    %v692 = vunpack.c.l.b16 %v176
    %v693 = vunpack.c.h.b16 %v176
    %v694 = vunpack.c.l.b16 %v177
    %v695 = vunpack.c.h.b16 %v177
    %v696 = vunpack.c.l.b16 %v178
    %v697 = vunpack.c.h.b16 %v178
    %v698 = vunpack.c.l.b16 %v179
    %v699 = vunpack.c.h.b16 %v179
    %v700 = vunpack.c.l.b16 %v180
    %v701 = vunpack.c.h.b16 %v180
    %v702 = vunpack.c.l.b16 %v181
    %v703 = vunpack.c.h.b16 %v181
    %v704 = vunpack.c.l.b16 %v182
    %v705 = vunpack.c.h.b16 %v182
    %v706 = vunpack.c.l.b16 %v183
    %v707 = vunpack.c.h.b16 %v183
    %v708 = vunpack.c.l.b16 %v184
    %v709 = vunpack.c.h.b16 %v184
    %v710 = vunpack.c.l.b16 %v185
    %v711 = vunpack.c.h.b16 %v185
    %v712 = vunpack.c.l.b16 %v186
    %v713 = vunpack.c.h.b16 %v186
    %v714 = vunpack.c.l.b16 %v187
    %v715 = vunpack.c.h.b16 %v187
    %v716 = vunpack.c.l.b16 %v188
    %v717 = vunpack.c.h.b16 %v188
    %v718 = vunpack.c.l.b16 %v189
    %v719 = vunpack.c.h.b16 %v189
    %v720 = vunpack.c.l.b16 %v190
    %v721 = vunpack.c.h.b16 %v190
    %v722 = vunpack.c.l.b16 %v191
    %v723 = vunpack.c.h.b16 %v191
    %v724 = vunpack.c.l.b16 %v192
    %v725 = vunpack.c.h.b16 %v192
    %v726 = vunpack.c.l.b16 %v193
    %v727 = vunpack.c.h.b16 %v193
    %v728 = vunpack.c.l.b16 %v194
    %v729 = vunpack.c.h.b16 %v194
    %v730 = vunpack.c.l.b16 %v195
    %v731 = vunpack.c.h.b16 %v195
    %v732 = vunpack.c.l.b16 %v196
    %v733 = vunpack.c.h.b16 %v196
    %v734 = vunpack.c.l.b16 %v197
    %v735 = vunpack.c.h.b16 %v197
    %v736 = vunpack.c.l.b16 %v198
    %v737 = vunpack.c.h.b16 %v198
    %v738 = vunpack.c.l.b16 %v199
    %v739 = vunpack.c.h.b16 %v199
    %v740 = vunpack.c.l.b16 %v200
    %v741 = vunpack.c.h.b16 %v200
    %v742 = vunpack.c.l.b16 %v201
    %v743 = vunpack.c.h.b16 %v201
    %v744 = vunpack.c.l.b16 %v202
    %v745 = vunpack.c.h.b16 %v202
    %v746 = vunpack.c.l.b16 %v203
    %v747 = vunpack.c.h.b16 %v203
    %v748 = vunpack.c.l.b16 %v204
    %v749 = vunpack.c.h.b16 %v204
    %v750 = vunpack.c.l.b16 %v205
    %v751 = vunpack.c.h.b16 %v205
    %v752 = vunpack.c.l.b16 %v206
    %v753 = vunpack.c.h.b16 %v206
    %v754 = vunpack.c.l.b16 %v207
    %v755 = vunpack.c.h.b16 %v207
    %v756 = vunpack.c.l.b16 %v208
    %v757 = vunpack.c.h.b16 %v208
    %v758 = vunpack.c.l.b16 %v209
    %v759 = vunpack.c.h.b16 %v209
    %v760 = vunpack.c.l.b16 %v210
    %v761 = vunpack.c.h.b16 %v210
    %v762 = vunpack.c.l.b16 %v211
    %v763 = vunpack.c.h.b16 %v211
    %v764 = vunpack.c.l.b16 %v212
    %v765 = vunpack.c.h.b16 %v212
    %v766 = vunpack.c.l.b16 %v213
    %v767 = vunpack.c.h.b16 %v213
    %v768 = vunpack.c.l.b16 %v214
    %v769 = vunpack.c.h.b16 %v214
    %v770 = vunpack.c.l.b16 %v215
    %v771 = vunpack.c.h.b16 %v215
    %v772 = vunpack.c.l.b16 %v216
    %v773 = vunpack.c.h.b16 %v216
    %v774 = vunpack.c.l.b16 %v217
    %v775 = vunpack.c.h.b16 %v217
    %v776 = vunpack.c.l.b16 %v218
    %v777 = vunpack.c.h.b16 %v218
    %v778 = vunpack.c.l.b16 %v219
    %v779 = vunpack.c.h.b16 %v219
    %v780 = vunpack.c.l.b16 %v220
    %v781 = vunpack.c.h.b16 %v220
    %v782 = vunpack.c.l.b16 %v221
    %v783 = vunpack.c.h.b16 %v221
    %v784 = vunpack.c.l.b16 %v222
    %v785 = vunpack.c.h.b16 %v222
    %v786 = vunpack.c.l.b16 %v223
    %v787 = vunpack.c.h.b16 %v223
    %v788 = vunpack.c.l.b16 %v224
    %v789 = vunpack.c.h.b16 %v224
    %v790 = vunpack.c.l.b16 %v225
    %v791 = vunpack.c.h.b16 %v225
    %v792 = vunpack.c.l.b16 %v226
    %v793 = vunpack.c.h.b16 %v226
    %v794 = vunpack.c.l.b16 %v227
    %v795 = vunpack.c.h.b16 %v227
    %v796 = vunpack.c.l.b16 %v228
    %v797 = vunpack.c.h.b16 %v228
    %v798 = vunpack.c.l.b16 %v229
    %v799 = vunpack.c.h.b16 %v229
    %v800 = vunpack.c.l.b16 %v230
    %v801 = vunpack.c.h.b16 %v230
    %v802 = vunpack.c.l.b16 %v231
    %v803 = vunpack.c.h.b16 %v231
    %v804 = vunpack.c.l.b16 %v232
    %v805 = vunpack.c.h.b16 %v232
    %v806 = vunpack.c.l.b16 %v233
    %v807 = vunpack.c.h.b16 %v233
    %v808 = vunpack.c.l.b16 %v234
    %v809 = vunpack.c.h.b16 %v234
    %v810 = vunpack.c.l.b16 %v235
    %v811 = vunpack.c.h.b16 %v235
    %v812 = vunpack.c.l.b16 %v236
    %v813 = vunpack.c.h.b16 %v236
    %v814 = vunpack.c.l.b16 %v237
    %v815 = vunpack.c.h.b16 %v237
    %v816 = vunpack.c.l.b16 %v238
    %v817 = vunpack.c.h.b16 %v238
    %v818 = vunpack.c.l.b16 %v239
    %v819 = vunpack.c.h.b16 %v239
    %v820 = vunpack.c.l.b16 %v240
    %v821 = vunpack.c.h.b16 %v240
    %v822 = vunpack.c.l.b16 %v241
    %v823 = vunpack.c.h.b16 %v241
    %v824 = vunpack.c.l.b16 %v242
    %v825 = vunpack.c.h.b16 %v242
    %v826 = vunpack.c.l.b16 %v243
    %v827 = vunpack.c.h.b16 %v243
    %v828 = vunpack.c.l.b16 %v244
    %v829 = vunpack.c.h.b16 %v244
    %v830 = vunpack.c.l.b16 %v245
    %v831 = vunpack.c.h.b16 %v245
    %v832 = vunpack.c.l.b16 %v246
    %v833 = vunpack.c.h.b16 %v246
    %v834 = vunpack.c.l.b16 %v247
    %v835 = vunpack.c.h.b16 %v247
    %v836 = vpack.c.b16 %v468, %v452
    %v837 = vpack.c.b16 %v469, %v453
    %v838 = vpack.c.b16 %v470, %v454
    %v839 = vpack.c.b16 %v471, %v455
    %v840 = vpack.c.b16 %v472, %v456
    %v841 = vpack.c.b16 %v473, %v457
    %v842 = vpack.c.b16 %v474, %v458
    %v843 = vpack.c.b16 %v475, %v459
    %v844 = vpack.c.b16 %v476, %v460
    %v845 = vpack.c.b16 %v477, %v461
    %v846 = vpack.c.b16 %v478, %v462
    %v847 = vpack.c.b16 %v479, %v463
    %v848 = vpack.c.b16 %v480, %v464
    %v849 = vpack.c.b16 %v481, %v465
    %v850 = vpack.c.b16 %v482, %v466
    %v851 = vpack.c.b16 %v483, %v467
    %v852 = vpack.c.b16 %v500, %v484
    %v853 = vpack.c.b16 %v501, %v485
    %v854 = vpack.c.b16 %v502, %v486
    %v855 = vpack.c.b16 %v503, %v487
    %v856 = vpack.c.b16 %v504, %v488
    %v857 = vpack.c.b16 %v505, %v489
    %v858 = vpack.c.b16 %v506, %v490
    %v859 = vpack.c.b16 %v507, %v491
    %v860 = vpack.c.b16 %v508, %v492
    %v861 = vpack.c.b16 %v509, %v493
    %v862 = vpack.c.b16 %v510, %v494
    %v863 = vpack.c.b16 %v511, %v495
    %v864 = vpack.c.b16 %v512, %v496
    %v865 = vpack.c.b16 %v513, %v497
    %v866 = vpack.c.b16 %v514, %v498
    %v867 = vpack.c.b16 %v515, %v499
    %v868 = vpack.c.b16 %v532, %v516
    %v869 = vpack.c.b16 %v533, %v517
    %v870 = vpack.c.b16 %v534, %v518
    %v871 = vpack.c.b16 %v535, %v519
    %v872 = vpack.c.b16 %v536, %v520
    %v873 = vpack.c.b16 %v537, %v521
    %v874 = vpack.c.b16 %v538, %v522
    %v875 = vpack.c.b16 %v539, %v523
    %v876 = vpack.c.b16 %v540, %v524
    %v877 = vpack.c.b16 %v541, %v525
    %v878 = vpack.c.b16 %v542, %v526
    %v879 = vpack.c.b16 %v543, %v527
    %v880 = vpack.c.b16 %v544, %v528
    %v881 = vpack.c.b16 %v545, %v529
    %v882 = vpack.c.b16 %v546, %v530
    %v883 = vpack.c.b16 %v547, %v531
    %v884 = vpack.c.b16 %v564, %v548
    %v885 = vpack.c.b16 %v565, %v549
    %v886 = vpack.c.b16 %v566, %v550
    %v887 = vpack.c.b16 %v567, %v551
    %v888 = vpack.c.b16 %v568, %v552
    %v889 = vpack.c.b16 %v569, %v553
    %v890 = vpack.c.b16 %v570, %v554
    %v891 = vpack.c.b16 %v571, %v555
    %v892 = vpack.c.b16 %v572, %v556
    %v893 = vpack.c.b16 %v573, %v557
    %v894 = vpack.c.b16 %v574, %v558
    %v895 = vpack.c.b16 %v575, %v559
    %v896 = vpack.c.b16 %v576, %v560
    %v897 = vpack.c.b16 %v577, %v561
    %v898 = vpack.c.b16 %v578, %v562
    %v899 = vpack.c.b16 %v579, %v563
    %v900 = vpack.c.b16 %v596, %v580
    %v901 = vpack.c.b16 %v597, %v581
    %v902 = vpack.c.b16 %v598, %v582
    %v903 = vpack.c.b16 %v599, %v583
    %v904 = vpack.c.b16 %v600, %v584
    %v905 = vpack.c.b16 %v601, %v585
    %v906 = vpack.c.b16 %v602, %v586
    %v907 = vpack.c.b16 %v603, %v587
    %v908 = vpack.c.b16 %v604, %v588
    %v909 = vpack.c.b16 %v605, %v589
    %v910 = vpack.c.b16 %v606, %v590
    %v911 = vpack.c.b16 %v607, %v591
    %v912 = vpack.c.b16 %v608, %v592
    %v913 = vpack.c.b16 %v609, %v593
    %v914 = vpack.c.b16 %v610, %v594
    %v915 = vpack.c.b16 %v611, %v595
    %v916 = vpack.c.b16 %v628, %v612
    %v917 = vpack.c.b16 %v629, %v613
    %v918 = vpack.c.b16 %v630, %v614
    %v919 = vpack.c.b16 %v631, %v615
    %v920 = vpack.c.b16 %v632, %v616
    %v921 = vpack.c.b16 %v633, %v617
    %v922 = vpack.c.b16 %v634, %v618
    %v923 = vpack.c.b16 %v635, %v619
    %v924 = vpack.c.b16 %v636, %v620
    %v925 = vpack.c.b16 %v637, %v621
    %v926 = vpack.c.b16 %v638, %v622
    %v927 = vpack.c.b16 %v639, %v623
    %v928 = vpack.c.b16 %v640, %v624
    %v929 = vpack.c.b16 %v641, %v625
    %v930 = vpack.c.b16 %v642, %v626
    %v931 = vpack.c.b16 %v643, %v627
    %v932 = vpack.c.b16 %v660, %v644
    %v933 = vpack.c.b16 %v661, %v645
    %v934 = vpack.c.b16 %v662, %v646
    %v935 = vpack.c.b16 %v663, %v647
    %v936 = vpack.c.b16 %v664, %v648
    %v937 = vpack.c.b16 %v665, %v649
    %v938 = vpack.c.b16 %v666, %v650
    %v939 = vpack.c.b16 %v667, %v651
    %v940 = vpack.c.b16 %v668, %v652
    %v941 = vpack.c.b16 %v669, %v653
    %v942 = vpack.c.b16 %v670, %v654
    %v943 = vpack.c.b16 %v671, %v655
    %v944 = vpack.c.b16 %v672, %v656
    %v945 = vpack.c.b16 %v673, %v657
    %v946 = vpack.c.b16 %v674, %v658
    %v947 = vpack.c.b16 %v675, %v659
    %v948 = vpack.c.b16 %v692, %v676
    %v949 = vpack.c.b16 %v693, %v677
    %v950 = vpack.c.b16 %v694, %v678
    %v951 = vpack.c.b16 %v695, %v679
    %v952 = vpack.c.b16 %v696, %v680
    %v953 = vpack.c.b16 %v697, %v681
    %v954 = vpack.c.b16 %v698, %v682
    %v955 = vpack.c.b16 %v699, %v683
    %v956 = vpack.c.b16 %v700, %v684
    %v957 = vpack.c.b16 %v701, %v685
    %v958 = vpack.c.b16 %v702, %v686
    %v959 = vpack.c.b16 %v703, %v687
    %v960 = vpack.c.b16 %v704, %v688
    %v961 = vpack.c.b16 %v705, %v689
    %v962 = vpack.c.b16 %v706, %v690
    %v963 = vpack.c.b16 %v707, %v691
    %v964 = vpack.c.b16 %v724, %v708
    %v965 = vpack.c.b16 %v725, %v709
    %v966 = vpack.c.b16 %v726, %v710
    %v967 = vpack.c.b16 %v727, %v711
    %v968 = vpack.c.b16 %v728, %v712
    %v969 = vpack.c.b16 %v729, %v713
    %v970 = vpack.c.b16 %v730, %v714
    %v971 = vpack.c.b16 %v731, %v715
    %v972 = vpack.c.b16 %v732, %v716
    %v973 = vpack.c.b16 %v733, %v717
    %v974 = vpack.c.b16 %v734, %v718
    %v975 = vpack.c.b16 %v735, %v719
    %v976 = vpack.c.b16 %v736, %v720
    %v977 = vpack.c.b16 %v737, %v721
    %v978 = vpack.c.b16 %v738, %v722
    %v979 = vpack.c.b16 %v739, %v723
    %v980 = vpack.c.b16 %v756, %v740
    %v981 = vpack.c.b16 %v757, %v741
    %v982 = vpack.c.b16 %v758, %v742
    %v983 = vpack.c.b16 %v759, %v743
    %v984 = vpack.c.b16 %v760, %v744
    %v985 = vpack.c.b16 %v761, %v745
    %v986 = vpack.c.b16 %v762, %v746
    %v987 = vpack.c.b16 %v763, %v747
    %v988 = vpack.c.b16 %v764, %v748
    %v989 = vpack.c.b16 %v765, %v749
    %v990 = vpack.c.b16 %v766, %v750
    %v991 = vpack.c.b16 %v767, %v751
    %v992 = vpack.c.b16 %v768, %v752
    %v993 = vpack.c.b16 %v769, %v753
    %v994 = vpack.c.b16 %v770, %v754
    %v995 = vpack.c.b16 %v771, %v755
    %v996 = vpack.c.b16 %v788, %v772
    %v997 = vpack.c.b16 %v789, %v773
    %v998 = vpack.c.b16 %v790, %v774
    %v999 = vpack.c.b16 %v791, %v775
    %v1000 = vpack.c.b16 %v792, %v776
    %v1001 = vpack.c.b16 %v793, %v777
    %v1002 = vpack.c.b16 %v794, %v778
    %v1003 = vpack.c.b16 %v795, %v779
    %v1004 = vpack.c.b16 %v796, %v780
    %v1005 = vpack.c.b16 %v797, %v781
    %v1006 = vpack.c.b16 %v798, %v782
    %v1007 = vpack.c.b16 %v799, %v783
    %v1008 = vpack.c.b16 %v800, %v784
    %v1009 = vpack.c.b16 %v801, %v785
    %v1010 = vpack.c.b16 %v802, %v786
    %v1011 = vpack.c.b16 %v803, %v787
    %v1012 = vpack.c.b16 %v820, %v804
    %v1013 = vpack.c.b16 %v821, %v805
    %v1014 = vpack.c.b16 %v822, %v806
    %v1015 = vpack.c.b16 %v823, %v807
    %v1016 = vpack.c.b16 %v824, %v808
    %v1017 = vpack.c.b16 %v825, %v809
    %v1018 = vpack.c.b16 %v826, %v810
    %v1019 = vpack.c.b16 %v827, %v811
    %v1020 = vpack.c.b16 %v828, %v812
    %v1021 = vpack.c.b16 %v829, %v813
    %v1022 = vpack.c.b16 %v830, %v814
    %v1023 = vpack.c.b16 %v831, %v815
    %v1024 = vpack.c.b16 %v832, %v816
    %v1025 = vpack.c.b16 %v833, %v817
    %v1026 = vpack.c.b16 %v834, %v818
    %v1027 = vpack.c.b16 %v835, %v819
    %vm1220 = vcmask 523264
    %v1222 = vsel %vm1220, %v258, 0
    %1224 = vmatpush.bf16.msra.mxu0 %v948
    %1225 = vmatpush.bf16.msra.mxu0 %v932
    %1226 = vmatpush.bf16.msra.mxu0 %v916
    %1227 = vmatpush.bf16.msra.mxu0 %v900
    %1228 = vmatpush.bf16.msra.mxu0 %v884
    %1229 = vmatpush.bf16.msra.mxu0 %v868
    %1230 = vmatpush.bf16.msra.mxu0 %v852
    %1231 = vmatpush.bf16.msra.mxu0 %v836
    %1232 = vmatmul.bf16.gmra.mxu0 %v257
    %v1233 = vpop.f32.mrf.mxu0
    %v1234 = vadd.f32 %v252, %v1233
    %v1235 = vpop.f32.mrf.mxu0
    %1236 = vdwg.mxu0
    %1237 = vmatpush.bf16.msra.mxu0 0
    %1238 = vmatpush.bf16.msra.mxu0 0
    %1239 = vmatpush.bf16.msra.mxu0 0
    %1240 = vmatpush.bf16.msra.mxu0 0
    %1241 = vmatpush.bf16.msra.mxu0 %v1012
    %1242 = vmatpush.bf16.msra.mxu0 %v996
    %1243 = vmatpush.bf16.msra.mxu0 %v980
    %1244 = vmatpush.bf16.msra.mxu0 %v964
    %1245 = vmatmul.bf16.gmra.mxu0 %v1222
    %v1246 = vpop.f32.mrf.mxu0
    %v1247 = vadd.f32 %v1234, %v1246
    %v1248 = vpop.f32.mrf.mxu0
    %1249 = vdwg.mxu0
    %1250 = vmatpush.bf16.msra.mxu0 %v949
    %1251 = vmatpush.bf16.msra.mxu0 %v933
    %1252 = vmatpush.bf16.msra.mxu0 %v917
    %1253 = vmatpush.bf16.msra.mxu0 %v901
    %1254 = vmatpush.bf16.msra.mxu0 %v885
    %1255 = vmatpush.bf16.msra.mxu0 %v869
    %1256 = vmatpush.bf16.msra.mxu0 %v853
    %1257 = vmatpush.bf16.msra.mxu0 %v837
    %1258 = vmatmul.bf16.gmra.mxu0 %v257
    %v1259 = vpop.f32.mrf.mxu0
    %v1260 = vadd.f32 %v252, %v1259
    %v1261 = vpop.f32.mrf.mxu0
    %1262 = vdwg.mxu0
    %1263 = vmatpush.bf16.msra.mxu0 0
    %1264 = vmatpush.bf16.msra.mxu0 0
    %1265 = vmatpush.bf16.msra.mxu0 0
    %1266 = vmatpush.bf16.msra.mxu0 0
    %1267 = vmatpush.bf16.msra.mxu0 %v1013
    %1268 = vmatpush.bf16.msra.mxu0 %v997
    %1269 = vmatpush.bf16.msra.mxu0 %v981
    %1270 = vmatpush.bf16.msra.mxu0 %v965
    %1271 = vmatmul.bf16.gmra.mxu0 %v1222
    %v1272 = vpop.f32.mrf.mxu0
    %v1273 = vadd.f32 %v1260, %v1272
    %v1274 = vpop.f32.mrf.mxu0
    %1275 = vdwg.mxu0
    %1276 = vmatpush.bf16.msra.mxu0 %v950
    %1277 = vmatpush.bf16.msra.mxu0 %v934
    %1278 = vmatpush.bf16.msra.mxu0 %v918
    %1279 = vmatpush.bf16.msra.mxu0 %v902
    %1280 = vmatpush.bf16.msra.mxu0 %v886
    %1281 = vmatpush.bf16.msra.mxu0 %v870
    %1282 = vmatpush.bf16.msra.mxu0 %v854
    %1283 = vmatpush.bf16.msra.mxu0 %v838
    %1284 = vmatmul.bf16.gmra.mxu0 %v257
    %v1285 = vpop.f32.mrf.mxu0
    %v1286 = vadd.f32 %v252, %v1285
    %v1287 = vpop.f32.mrf.mxu0
    %1288 = vdwg.mxu0
    %1289 = vmatpush.bf16.msra.mxu0 0
    %1290 = vmatpush.bf16.msra.mxu0 0
    %1291 = vmatpush.bf16.msra.mxu0 0
    %1292 = vmatpush.bf16.msra.mxu0 0
    %1293 = vmatpush.bf16.msra.mxu0 %v1014
    %1294 = vmatpush.bf16.msra.mxu0 %v998
    %1295 = vmatpush.bf16.msra.mxu0 %v982
    %1296 = vmatpush.bf16.msra.mxu0 %v966
    %1297 = vmatmul.bf16.gmra.mxu0 %v1222
    %v1298 = vpop.f32.mrf.mxu0
    %v1299 = vadd.f32 %v1286, %v1298
    %v1300 = vpop.f32.mrf.mxu0
    %1301 = vdwg.mxu0
    %1302 = vmatpush.bf16.msra.mxu0 %v951
    %1303 = vmatpush.bf16.msra.mxu0 %v935
    %1304 = vmatpush.bf16.msra.mxu0 %v919
    %1305 = vmatpush.bf16.msra.mxu0 %v903
    %1306 = vmatpush.bf16.msra.mxu0 %v887
    %1307 = vmatpush.bf16.msra.mxu0 %v871
    %1308 = vmatpush.bf16.msra.mxu0 %v855
    %1309 = vmatpush.bf16.msra.mxu0 %v839
    %1310 = vmatmul.bf16.gmra.mxu0 %v257
    %v1311 = vpop.f32.mrf.mxu0
    %v1312 = vadd.f32 %v252, %v1311
    %v1313 = vpop.f32.mrf.mxu0
    %1314 = vdwg.mxu0
    %1315 = vmatpush.bf16.msra.mxu0 0
    %1316 = vmatpush.bf16.msra.mxu0 0
    %1317 = vmatpush.bf16.msra.mxu0 0
    %1318 = vmatpush.bf16.msra.mxu0 0
    %1319 = vmatpush.bf16.msra.mxu0 %v1015
    %1320 = vmatpush.bf16.msra.mxu0 %v999
    %1321 = vmatpush.bf16.msra.mxu0 %v983
    %1322 = vmatpush.bf16.msra.mxu0 %v967
    %1323 = vmatmul.bf16.gmra.mxu0 %v1222
    %v1324 = vpop.f32.mrf.mxu0
    %v1325 = vadd.f32 %v1312, %v1324
    %v1326 = vpop.f32.mrf.mxu0
    %1327 = vdwg.mxu0
    %1328 = vmatpush.bf16.msra.mxu0 %v952
    %1329 = vmatpush.bf16.msra.mxu0 %v936
    %1330 = vmatpush.bf16.msra.mxu0 %v920
    %1331 = vmatpush.bf16.msra.mxu0 %v904
    %1332 = vmatpush.bf16.msra.mxu0 %v888
    %1333 = vmatpush.bf16.msra.mxu0 %v872
    %1334 = vmatpush.bf16.msra.mxu0 %v856
    %1335 = vmatpush.bf16.msra.mxu0 %v840
    %1336 = vmatmul.bf16.gmra.mxu0 %v257
    %v1337 = vpop.f32.mrf.mxu0
    %v1338 = vadd.f32 %v252, %v1337
    %v1339 = vpop.f32.mrf.mxu0
    %1340 = vdwg.mxu0
    %1341 = vmatpush.bf16.msra.mxu0 0
    %1342 = vmatpush.bf16.msra.mxu0 0
    %1343 = vmatpush.bf16.msra.mxu0 0
    %1344 = vmatpush.bf16.msra.mxu0 0
    %1345 = vmatpush.bf16.msra.mxu0 %v1016
    %1346 = vmatpush.bf16.msra.mxu0 %v1000
    %1347 = vmatpush.bf16.msra.mxu0 %v984
    %1348 = vmatpush.bf16.msra.mxu0 %v968
    %1349 = vmatmul.bf16.gmra.mxu0 %v1222
    %v1350 = vpop.f32.mrf.mxu0
    %v1351 = vadd.f32 %v1338, %v1350
    %v1352 = vpop.f32.mrf.mxu0
    %1353 = vdwg.mxu0
    %1354 = vmatpush.bf16.msra.mxu0 %v953
    %1355 = vmatpush.bf16.msra.mxu0 %v937
    %1356 = vmatpush.bf16.msra.mxu0 %v921
    %1357 = vmatpush.bf16.msra.mxu0 %v905
    %1358 = vmatpush.bf16.msra.mxu0 %v889
    %1359 = vmatpush.bf16.msra.mxu0 %v873
    %1360 = vmatpush.bf16.msra.mxu0 %v857
    %1361 = vmatpush.bf16.msra.mxu0 %v841
    %1362 = vmatmul.bf16.gmra.mxu0 %v257
    %v1363 = vpop.f32.mrf.mxu0
    %v1364 = vadd.f32 %v252, %v1363
    %v1365 = vpop.f32.mrf.mxu0
    %1366 = vdwg.mxu0
    %1367 = vmatpush.bf16.msra.mxu0 0
    %1368 = vmatpush.bf16.msra.mxu0 0
    %1369 = vmatpush.bf16.msra.mxu0 0
    %1370 = vmatpush.bf16.msra.mxu0 0
    %1371 = vmatpush.bf16.msra.mxu0 %v1017
    %1372 = vmatpush.bf16.msra.mxu0 %v1001
    %1373 = vmatpush.bf16.msra.mxu0 %v985
    %1374 = vmatpush.bf16.msra.mxu0 %v969
    %1375 = vmatmul.bf16.gmra.mxu0 %v1222
    %v1376 = vpop.f32.mrf.mxu0
    %v1377 = vadd.f32 %v1364, %v1376
    %v1378 = vpop.f32.mrf.mxu0
    %1379 = vdwg.mxu0
    %1380 = vmatpush.bf16.msra.mxu0 %v954
    %1381 = vmatpush.bf16.msra.mxu0 %v938
    %1382 = vmatpush.bf16.msra.mxu0 %v922
    %1383 = vmatpush.bf16.msra.mxu0 %v906
    %1384 = vmatpush.bf16.msra.mxu0 %v890
    %1385 = vmatpush.bf16.msra.mxu0 %v874
    %1386 = vmatpush.bf16.msra.mxu0 %v858
    %1387 = vmatpush.bf16.msra.mxu0 %v842
    %1388 = vmatmul.bf16.gmra.mxu0 %v257
    %v1389 = vpop.f32.mrf.mxu0
    %v1390 = vadd.f32 %v252, %v1389
    %v1391 = vpop.f32.mrf.mxu0
    %1392 = vdwg.mxu0
    %1393 = vmatpush.bf16.msra.mxu0 0
    %1394 = vmatpush.bf16.msra.mxu0 0
    %1395 = vmatpush.bf16.msra.mxu0 0
    %1396 = vmatpush.bf16.msra.mxu0 0
    %1397 = vmatpush.bf16.msra.mxu0 %v1018
    %1398 = vmatpush.bf16.msra.mxu0 %v1002
    %1399 = vmatpush.bf16.msra.mxu0 %v986
    %1400 = vmatpush.bf16.msra.mxu0 %v970
    %1401 = vmatmul.bf16.gmra.mxu0 %v1222
    %v1402 = vpop.f32.mrf.mxu0
    %v1403 = vadd.f32 %v1390, %v1402
    %v1404 = vpop.f32.mrf.mxu0
    %1405 = vdwg.mxu0
    %1406 = vmatpush.bf16.msra.mxu0 %v955
    %1407 = vmatpush.bf16.msra.mxu0 %v939
    %1408 = vmatpush.bf16.msra.mxu0 %v923
    %1409 = vmatpush.bf16.msra.mxu0 %v907
    %1410 = vmatpush.bf16.msra.mxu0 %v891
    %1411 = vmatpush.bf16.msra.mxu0 %v875
    %1412 = vmatpush.bf16.msra.mxu0 %v859
    %1413 = vmatpush.bf16.msra.mxu0 %v843
    %1414 = vmatmul.bf16.gmra.mxu0 %v257
    %v1415 = vpop.f32.mrf.mxu0
    %v1416 = vadd.f32 %v252, %v1415
    %v1417 = vpop.f32.mrf.mxu0
    %1418 = vdwg.mxu0
    %1419 = vmatpush.bf16.msra.mxu0 0
    %1420 = vmatpush.bf16.msra.mxu0 0
    %1421 = vmatpush.bf16.msra.mxu0 0
    %1422 = vmatpush.bf16.msra.mxu0 0
    %1423 = vmatpush.bf16.msra.mxu0 %v1019
    %1424 = vmatpush.bf16.msra.mxu0 %v1003
    %1425 = vmatpush.bf16.msra.mxu0 %v987
    %1426 = vmatpush.bf16.msra.mxu0 %v971
    %1427 = vmatmul.bf16.gmra.mxu0 %v1222
    %v1428 = vpop.f32.mrf.mxu0
    %v1429 = vadd.f32 %v1416, %v1428
    %v1430 = vpop.f32.mrf.mxu0
    %1431 = vdwg.mxu0
    %1432 = vmatpush.bf16.msra.mxu0 %v956
    %1433 = vmatpush.bf16.msra.mxu0 %v940
    %1434 = vmatpush.bf16.msra.mxu0 %v924
    %1435 = vmatpush.bf16.msra.mxu0 %v908
    %1436 = vmatpush.bf16.msra.mxu0 %v892
    %1437 = vmatpush.bf16.msra.mxu0 %v876
    %1438 = vmatpush.bf16.msra.mxu0 %v860
    %1439 = vmatpush.bf16.msra.mxu0 %v844
    %1440 = vmatmul.bf16.gmra.mxu0 %v257
    %v1441 = vpop.f32.mrf.mxu0
    %v1442 = vadd.f32 %v252, %v1441
    %v1443 = vpop.f32.mrf.mxu0
    %1444 = vdwg.mxu0
    %1445 = vmatpush.bf16.msra.mxu0 0
    %1446 = vmatpush.bf16.msra.mxu0 0
    %1447 = vmatpush.bf16.msra.mxu0 0
    %1448 = vmatpush.bf16.msra.mxu0 0
    %1449 = vmatpush.bf16.msra.mxu0 %v1020
    %1450 = vmatpush.bf16.msra.mxu0 %v1004
    %1451 = vmatpush.bf16.msra.mxu0 %v988
    %1452 = vmatpush.bf16.msra.mxu0 %v972
    %1453 = vmatmul.bf16.gmra.mxu0 %v1222
    %v1454 = vpop.f32.mrf.mxu0
    %v1455 = vadd.f32 %v1442, %v1454
    %v1456 = vpop.f32.mrf.mxu0
    %1457 = vdwg.mxu0
    %1458 = vmatpush.bf16.msra.mxu0 %v957
    %1459 = vmatpush.bf16.msra.mxu0 %v941
    %1460 = vmatpush.bf16.msra.mxu0 %v925
    %1461 = vmatpush.bf16.msra.mxu0 %v909
    %1462 = vmatpush.bf16.msra.mxu0 %v893
    %1463 = vmatpush.bf16.msra.mxu0 %v877
    %1464 = vmatpush.bf16.msra.mxu0 %v861
    %1465 = vmatpush.bf16.msra.mxu0 %v845
    %1466 = vmatmul.bf16.gmra.mxu0 %v257
    %v1467 = vpop.f32.mrf.mxu0
    %v1468 = vadd.f32 %v252, %v1467
    %v1469 = vpop.f32.mrf.mxu0
    %1470 = vdwg.mxu0
    %1471 = vmatpush.bf16.msra.mxu0 0
    %1472 = vmatpush.bf16.msra.mxu0 0
    %1473 = vmatpush.bf16.msra.mxu0 0
    %1474 = vmatpush.bf16.msra.mxu0 0
    %1475 = vmatpush.bf16.msra.mxu0 %v1021
    %1476 = vmatpush.bf16.msra.mxu0 %v1005
    %1477 = vmatpush.bf16.msra.mxu0 %v989
    %1478 = vmatpush.bf16.msra.mxu0 %v973
    %1479 = vmatmul.bf16.gmra.mxu0 %v1222
    %v1480 = vpop.f32.mrf.mxu0
    %v1481 = vadd.f32 %v1468, %v1480
    %v1482 = vpop.f32.mrf.mxu0
    %1483 = vdwg.mxu0
    %1484 = vmatpush.bf16.msra.mxu0 %v958
    %1485 = vmatpush.bf16.msra.mxu0 %v942
    %1486 = vmatpush.bf16.msra.mxu0 %v926
    %1487 = vmatpush.bf16.msra.mxu0 %v910
    %1488 = vmatpush.bf16.msra.mxu0 %v894
    %1489 = vmatpush.bf16.msra.mxu0 %v878
    %1490 = vmatpush.bf16.msra.mxu0 %v862
    %1491 = vmatpush.bf16.msra.mxu0 %v846
    %1492 = vmatmul.bf16.gmra.mxu0 %v257
    %v1493 = vpop.f32.mrf.mxu0
    %v1494 = vadd.f32 %v252, %v1493
    %v1495 = vpop.f32.mrf.mxu0
    %1496 = vdwg.mxu0
    %1497 = vmatpush.bf16.msra.mxu0 0
    %1498 = vmatpush.bf16.msra.mxu0 0
    %1499 = vmatpush.bf16.msra.mxu0 0
    %1500 = vmatpush.bf16.msra.mxu0 0
    %1501 = vmatpush.bf16.msra.mxu0 %v1022
    %1502 = vmatpush.bf16.msra.mxu0 %v1006
    %1503 = vmatpush.bf16.msra.mxu0 %v990
    %1504 = vmatpush.bf16.msra.mxu0 %v974
    %1505 = vmatmul.bf16.gmra.mxu0 %v1222
    %v1506 = vpop.f32.mrf.mxu0
    %v1507 = vadd.f32 %v1494, %v1506
    %v1508 = vpop.f32.mrf.mxu0
    %1509 = vdwg.mxu0
    %1510 = vmatpush.bf16.msra.mxu0 %v959
    %1511 = vmatpush.bf16.msra.mxu0 %v943
    %1512 = vmatpush.bf16.msra.mxu0 %v927
    %1513 = vmatpush.bf16.msra.mxu0 %v911
    %1514 = vmatpush.bf16.msra.mxu0 %v895
    %1515 = vmatpush.bf16.msra.mxu0 %v879
    %1516 = vmatpush.bf16.msra.mxu0 %v863
    %1517 = vmatpush.bf16.msra.mxu0 %v847
    %1518 = vmatmul.bf16.gmra.mxu0 %v257
    %v1519 = vpop.f32.mrf.mxu0
    %v1520 = vadd.f32 %v252, %v1519
    %v1521 = vpop.f32.mrf.mxu0
    %1522 = vdwg.mxu0
    %1523 = vmatpush.bf16.msra.mxu0 0
    %1524 = vmatpush.bf16.msra.mxu0 0
    %1525 = vmatpush.bf16.msra.mxu0 0
    %1526 = vmatpush.bf16.msra.mxu0 0
    %1527 = vmatpush.bf16.msra.mxu0 %v1023
    %1528 = vmatpush.bf16.msra.mxu0 %v1007
    %1529 = vmatpush.bf16.msra.mxu0 %v991
    %1530 = vmatpush.bf16.msra.mxu0 %v975
    %1531 = vmatmul.bf16.gmra.mxu0 %v1222
    %v1532 = vpop.f32.mrf.mxu0
    %v1533 = vadd.f32 %v1520, %v1532
    %v1534 = vpop.f32.mrf.mxu0
    %1535 = vdwg.mxu0
    %1536 = vmatpush.bf16.msra.mxu0 %v960
    %1537 = vmatpush.bf16.msra.mxu0 %v944
    %1538 = vmatpush.bf16.msra.mxu0 %v928
    %1539 = vmatpush.bf16.msra.mxu0 %v912
    %1540 = vmatpush.bf16.msra.mxu0 %v896
    %1541 = vmatpush.bf16.msra.mxu0 %v880
    %1542 = vmatpush.bf16.msra.mxu0 %v864
    %1543 = vmatpush.bf16.msra.mxu0 %v848
    %1544 = vmatmul.bf16.gmra.mxu0 %v257
    %v1545 = vpop.f32.mrf.mxu0
    %v1546 = vadd.f32 %v252, %v1545
    %v1547 = vpop.f32.mrf.mxu0
    %1548 = vdwg.mxu0
    %1549 = vmatpush.bf16.msra.mxu0 0
    %1550 = vmatpush.bf16.msra.mxu0 0
    %1551 = vmatpush.bf16.msra.mxu0 0
    %1552 = vmatpush.bf16.msra.mxu0 0
    %1553 = vmatpush.bf16.msra.mxu0 %v1024
    %1554 = vmatpush.bf16.msra.mxu0 %v1008
    %1555 = vmatpush.bf16.msra.mxu0 %v992
    %1556 = vmatpush.bf16.msra.mxu0 %v976
    %1557 = vmatmul.bf16.gmra.mxu0 %v1222
    %v1558 = vpop.f32.mrf.mxu0
    %v1559 = vadd.f32 %v1546, %v1558
    %v1560 = vpop.f32.mrf.mxu0
    %1561 = vdwg.mxu0
    %1562 = vmatpush.bf16.msra.mxu0 %v961
    %1563 = vmatpush.bf16.msra.mxu0 %v945
    %1564 = vmatpush.bf16.msra.mxu0 %v929
    %1565 = vmatpush.bf16.msra.mxu0 %v913
    %1566 = vmatpush.bf16.msra.mxu0 %v897
    %1567 = vmatpush.bf16.msra.mxu0 %v881
    %1568 = vmatpush.bf16.msra.mxu0 %v865
    %1569 = vmatpush.bf16.msra.mxu0 %v849
    %1570 = vmatmul.bf16.gmra.mxu0 %v257
    %v1571 = vpop.f32.mrf.mxu0
    %v1572 = vadd.f32 %v252, %v1571
    %v1573 = vpop.f32.mrf.mxu0
    %1574 = vdwg.mxu0
    %1575 = vmatpush.bf16.msra.mxu0 0
    %1576 = vmatpush.bf16.msra.mxu0 0
    %1577 = vmatpush.bf16.msra.mxu0 0
    %1578 = vmatpush.bf16.msra.mxu0 0
    %1579 = vmatpush.bf16.msra.mxu0 %v1025
    %1580 = vmatpush.bf16.msra.mxu0 %v1009
    %1581 = vmatpush.bf16.msra.mxu0 %v993
    %1582 = vmatpush.bf16.msra.mxu0 %v977
    %1583 = vmatmul.bf16.gmra.mxu0 %v1222
    %v1584 = vpop.f32.mrf.mxu0
    %v1585 = vadd.f32 %v1572, %v1584
    %v1586 = vpop.f32.mrf.mxu0
    %1587 = vdwg.mxu0
    %1588 = vmatpush.bf16.msra.mxu0 %v962
    %1589 = vmatpush.bf16.msra.mxu0 %v946
    %1590 = vmatpush.bf16.msra.mxu0 %v930
    %1591 = vmatpush.bf16.msra.mxu0 %v914
    %1592 = vmatpush.bf16.msra.mxu0 %v898
    %1593 = vmatpush.bf16.msra.mxu0 %v882
    %1594 = vmatpush.bf16.msra.mxu0 %v866
    %1595 = vmatpush.bf16.msra.mxu0 %v850
    %1596 = vmatmul.bf16.gmra.mxu0 %v257
    %v1597 = vpop.f32.mrf.mxu0
    %v1598 = vadd.f32 %v252, %v1597
    %v1599 = vpop.f32.mrf.mxu0
    %1600 = vdwg.mxu0
    %1601 = vmatpush.bf16.msra.mxu0 0
    %1602 = vmatpush.bf16.msra.mxu0 0
    %1603 = vmatpush.bf16.msra.mxu0 0
    %1604 = vmatpush.bf16.msra.mxu0 0
    %1605 = vmatpush.bf16.msra.mxu0 %v1026
    %1606 = vmatpush.bf16.msra.mxu0 %v1010
    %1607 = vmatpush.bf16.msra.mxu0 %v994
    %1608 = vmatpush.bf16.msra.mxu0 %v978
    %1609 = vmatmul.bf16.gmra.mxu0 %v1222
    %v1610 = vpop.f32.mrf.mxu0
    %v1611 = vadd.f32 %v1598, %v1610
    %v1612 = vpop.f32.mrf.mxu0
    %1613 = vdwg.mxu0
    %1614 = vmatpush.bf16.msra.mxu0 %v963
    %1615 = vmatpush.bf16.msra.mxu0 %v947
    %1616 = vmatpush.bf16.msra.mxu0 %v931
    %1617 = vmatpush.bf16.msra.mxu0 %v915
    %1618 = vmatpush.bf16.msra.mxu0 %v899
    %1619 = vmatpush.bf16.msra.mxu0 %v883
    %1620 = vmatpush.bf16.msra.mxu0 %v867
    %1621 = vmatpush.bf16.msra.mxu0 %v851
    %1622 = vmatmul.bf16.gmra.mxu0 %v257
    %v1623 = vpop.f32.mrf.mxu0
    %v1624 = vadd.f32 %v252, %v1623
    %v1625 = vpop.f32.mrf.mxu0
    %1626 = vdwg.mxu0
    %1627 = vmatpush.bf16.msra.mxu0 0
    %1628 = vmatpush.bf16.msra.mxu0 0
    %1629 = vmatpush.bf16.msra.mxu0 0
    %1630 = vmatpush.bf16.msra.mxu0 0
    %1631 = vmatpush.bf16.msra.mxu0 %v1027
    %1632 = vmatpush.bf16.msra.mxu0 %v1011
    %1633 = vmatpush.bf16.msra.mxu0 %v995
    %1634 = vmatpush.bf16.msra.mxu0 %v979
    %1635 = vmatmul.bf16.gmra.mxu0 %v1222
    %v1636 = vpop.f32.mrf.mxu0
    %v1637 = vadd.f32 %v1624, %v1636
    %v1638 = vpop.f32.mrf.mxu0
    %1639 = vdwg.mxu0
    %v1640 = vld [vmem:[#allocation5] sm:$0xff]
    %v1641 = vld [vmem:[#allocation5 + $0x8] sm:$0xff]
    %v1642 = vld [vmem:[#allocation5 + $0x10] sm:$0xff]
    %v1643 = vld [vmem:[#allocation5 + $0x18] sm:$0xff]
    %v1644 = vld [vmem:[#allocation5 + $0x20] sm:$0xff]
    %v1645 = vld [vmem:[#allocation5 + $0x28] sm:$0xff]
    %v1646 = vld [vmem:[#allocation5 + $0x30] sm:$0xff]
    %v1647 = vld [vmem:[#allocation5 + $0x38] sm:$0xff]
    %v1648 = vld [vmem:[#allocation5 + $0x40] sm:$0xff]
    %v1649 = vld [vmem:[#allocation5 + $0x48] sm:$0xff]
    %v1650 = vld [vmem:[#allocation5 + $0x50] sm:$0xff]
    %v1651 = vld [vmem:[#allocation5 + $0x58] sm:$0xff]
    %v1652 = vld [vmem:[#allocation5 + $0x60] sm:$0xff]
    %v1653 = vld [vmem:[#allocation5 + $0x68] sm:$0xff]
    %v1654 = vld [vmem:[#allocation5 + $0x70] sm:$0xff]
    %v1655 = vld [vmem:[#allocation5 + $0x78] sm:$0xff]
    %v1656 = vld [vmem:[%s4] sm:$0xf]
    %1658 = vset.pattern.permute.xlu0 0
    %1659 = vperm.xlu0 %1658, %v1656
    %v1660 = vpop.permute.xlu0 %1659
    %v1662 = vperm.slane %v1640, 0
    %v1663 = vperm.slane %v1641, 0
    %v1664 = vperm.slane %v1642, 0
    %v1665 = vperm.slane %v1643, 0
    %v1666 = vperm.slane %v1644, 0
    %v1667 = vperm.slane %v1645, 0
    %v1668 = vperm.slane %v1646, 0
    %v1669 = vperm.slane %v1647, 0
    %v1670 = vperm.slane %v1648, 0
    %v1671 = vperm.slane %v1649, 0
    %v1672 = vperm.slane %v1650, 0
    %v1673 = vperm.slane %v1651, 0
    %v1674 = vperm.slane %v1652, 0
    %v1675 = vperm.slane %v1653, 0
    %v1676 = vperm.slane %v1654, 0
    %v1677 = vperm.slane %v1655, 0
    %v1678 = vmul.f32 %v1660, %v1662
    %v1679 = vmul.f32 %v1660, %v1663
    %v1680 = vmul.f32 %v1660, %v1664
    %v1681 = vmul.f32 %v1660, %v1665
    %v1682 = vmul.f32 %v1660, %v1666
    %v1683 = vmul.f32 %v1660, %v1667
    %v1684 = vmul.f32 %v1660, %v1668
    %v1685 = vmul.f32 %v1660, %v1669
    %v1686 = vmul.f32 %v1660, %v1670
    %v1687 = vmul.f32 %v1660, %v1671
    %v1688 = vmul.f32 %v1660, %v1672
    %v1689 = vmul.f32 %v1660, %v1673
    %v1690 = vmul.f32 %v1660, %v1674
    %v1691 = vmul.f32 %v1660, %v1675
    %v1692 = vmul.f32 %v1660, %v1676
    %v1693 = vmul.f32 %v1660, %v1677
    %1694 = vset.pattern.permute.xlu0 1
    %1695 = vperm.xlu0 %1694, %v1656
    %v1696 = vpop.permute.xlu0 %1695
    %v1698 = vperm.slane %v1640, 1
    %v1699 = vperm.slane %v1641, 1
    %v1700 = vperm.slane %v1642, 1
    %v1701 = vperm.slane %v1643, 1
    %v1702 = vperm.slane %v1644, 1
    %v1703 = vperm.slane %v1645, 1
    %v1704 = vperm.slane %v1646, 1
    %v1705 = vperm.slane %v1647, 1
    %v1706 = vperm.slane %v1648, 1
    %v1707 = vperm.slane %v1649, 1
    %v1708 = vperm.slane %v1650, 1
    %v1709 = vperm.slane %v1651, 1
    %v1710 = vperm.slane %v1652, 1
    %v1711 = vperm.slane %v1653, 1
    %v1712 = vperm.slane %v1654, 1
    %v1713 = vperm.slane %v1655, 1
    %v1714 = vmul.f32 %v1696, %v1698
    %v1715 = vmul.f32 %v1696, %v1699
    %v1716 = vmul.f32 %v1696, %v1700
    %v1717 = vmul.f32 %v1696, %v1701
    %v1718 = vmul.f32 %v1696, %v1702
    %v1719 = vmul.f32 %v1696, %v1703
    %v1720 = vmul.f32 %v1696, %v1704
    %v1721 = vmul.f32 %v1696, %v1705
    %v1722 = vmul.f32 %v1696, %v1706
    %v1723 = vmul.f32 %v1696, %v1707
    %v1724 = vmul.f32 %v1696, %v1708
    %v1725 = vmul.f32 %v1696, %v1709
    %v1726 = vmul.f32 %v1696, %v1710
    %v1727 = vmul.f32 %v1696, %v1711
    %v1728 = vmul.f32 %v1696, %v1712
    %v1729 = vmul.f32 %v1696, %v1713
    %v1730 = vadd.f32 %v1678, %v1714
    %v1731 = vadd.f32 %v1679, %v1715
    %v1732 = vadd.f32 %v1680, %v1716
    %v1733 = vadd.f32 %v1681, %v1717
    %v1734 = vadd.f32 %v1682, %v1718
    %v1735 = vadd.f32 %v1683, %v1719
    %v1736 = vadd.f32 %v1684, %v1720
    %v1737 = vadd.f32 %v1685, %v1721
    %v1738 = vadd.f32 %v1686, %v1722
    %v1739 = vadd.f32 %v1687, %v1723
    %v1740 = vadd.f32 %v1688, %v1724
    %v1741 = vadd.f32 %v1689, %v1725
    %v1742 = vadd.f32 %v1690, %v1726
    %v1743 = vadd.f32 %v1691, %v1727
    %v1744 = vadd.f32 %v1692, %v1728
    %v1745 = vadd.f32 %v1693, %v1729
    %1746 = vset.pattern.permute.xlu0 2
    %1747 = vperm.xlu0 %1746, %v1656
    %v1748 = vpop.permute.xlu0 %1747
    %v1750 = vperm.slane %v1640, 2
    %v1751 = vperm.slane %v1641, 2
    %v1752 = vperm.slane %v1642, 2
    %v1753 = vperm.slane %v1643, 2
    %v1754 = vperm.slane %v1644, 2
    %v1755 = vperm.slane %v1645, 2
    %v1756 = vperm.slane %v1646, 2
    %v1757 = vperm.slane %v1647, 2
    %v1758 = vperm.slane %v1648, 2
    %v1759 = vperm.slane %v1649, 2
    %v1760 = vperm.slane %v1650, 2
    %v1761 = vperm.slane %v1651, 2
    %v1762 = vperm.slane %v1652, 2
    %v1763 = vperm.slane %v1653, 2
    %v1764 = vperm.slane %v1654, 2
    %v1765 = vperm.slane %v1655, 2
    %v1766 = vmul.f32 %v1748, %v1750
    %v1767 = vmul.f32 %v1748, %v1751
    %v1768 = vmul.f32 %v1748, %v1752
    %v1769 = vmul.f32 %v1748, %v1753
    %v1770 = vmul.f32 %v1748, %v1754
    %v1771 = vmul.f32 %v1748, %v1755
    %v1772 = vmul.f32 %v1748, %v1756
    %v1773 = vmul.f32 %v1748, %v1757
    %v1774 = vmul.f32 %v1748, %v1758
    %v1775 = vmul.f32 %v1748, %v1759
    %v1776 = vmul.f32 %v1748, %v1760
    %v1777 = vmul.f32 %v1748, %v1761
    %v1778 = vmul.f32 %v1748, %v1762
    %v1779 = vmul.f32 %v1748, %v1763
    %v1780 = vmul.f32 %v1748, %v1764
    %v1781 = vmul.f32 %v1748, %v1765
    %v1782 = vadd.f32 %v1730, %v1766
    %v1783 = vadd.f32 %v1731, %v1767
    %v1784 = vadd.f32 %v1732, %v1768
    %v1785 = vadd.f32 %v1733, %v1769
    %v1786 = vadd.f32 %v1734, %v1770
    %v1787 = vadd.f32 %v1735, %v1771
    %v1788 = vadd.f32 %v1736, %v1772
    %v1789 = vadd.f32 %v1737, %v1773
    %v1790 = vadd.f32 %v1738, %v1774
    %v1791 = vadd.f32 %v1739, %v1775
    %v1792 = vadd.f32 %v1740, %v1776
    %v1793 = vadd.f32 %v1741, %v1777
    %v1794 = vadd.f32 %v1742, %v1778
    %v1795 = vadd.f32 %v1743, %v1779
    %v1796 = vadd.f32 %v1744, %v1780
    %v1797 = vadd.f32 %v1745, %v1781
    %1798 = vset.pattern.permute.xlu0 3
    %1799 = vperm.xlu0 %1798, %v1656
    %v1800 = vpop.permute.xlu0 %1799
    %v1802 = vperm.slane %v1640, 3
    %v1803 = vperm.slane %v1641, 3
    %v1804 = vperm.slane %v1642, 3
    %v1805 = vperm.slane %v1643, 3
    %v1806 = vperm.slane %v1644, 3
    %v1807 = vperm.slane %v1645, 3
    %v1808 = vperm.slane %v1646, 3
    %v1809 = vperm.slane %v1647, 3
    %v1810 = vperm.slane %v1648, 3
    %v1811 = vperm.slane %v1649, 3
    %v1812 = vperm.slane %v1650, 3
    %v1813 = vperm.slane %v1651, 3
    %v1814 = vperm.slane %v1652, 3
    %v1815 = vperm.slane %v1653, 3
    %v1816 = vperm.slane %v1654, 3
    %v1817 = vperm.slane %v1655, 3
    %v1818 = vmul.f32 %v1800, %v1802
    %v1819 = vmul.f32 %v1800, %v1803
    %v1820 = vmul.f32 %v1800, %v1804
    %v1821 = vmul.f32 %v1800, %v1805
    %v1822 = vmul.f32 %v1800, %v1806
    %v1823 = vmul.f32 %v1800, %v1807
    %v1824 = vmul.f32 %v1800, %v1808
    %v1825 = vmul.f32 %v1800, %v1809
    %v1826 = vmul.f32 %v1800, %v1810
    %v1827 = vmul.f32 %v1800, %v1811
    %v1828 = vmul.f32 %v1800, %v1812
    %v1829 = vmul.f32 %v1800, %v1813
    %v1830 = vmul.f32 %v1800, %v1814
    %v1831 = vmul.f32 %v1800, %v1815
    %v1832 = vmul.f32 %v1800, %v1816
    %v1833 = vmul.f32 %v1800, %v1817
    %v1834 = vadd.f32 %v1782, %v1818
    %v1835 = vadd.f32 %v1783, %v1819
    %v1836 = vadd.f32 %v1784, %v1820
    %v1837 = vadd.f32 %v1785, %v1821
    %v1838 = vadd.f32 %v1786, %v1822
    %v1839 = vadd.f32 %v1787, %v1823
    %v1840 = vadd.f32 %v1788, %v1824
    %v1841 = vadd.f32 %v1789, %v1825
    %v1842 = vadd.f32 %v1790, %v1826
    %v1843 = vadd.f32 %v1791, %v1827
    %v1844 = vadd.f32 %v1792, %v1828
    %v1845 = vadd.f32 %v1793, %v1829
    %v1846 = vadd.f32 %v1794, %v1830
    %v1847 = vadd.f32 %v1795, %v1831
    %v1848 = vadd.f32 %v1796, %v1832
    %v1849 = vadd.f32 %v1797, %v1833
    %v1850 = vperm.slane %v1640, 4
    %v1851 = vperm.slane %v1641, 4
    %v1852 = vperm.slane %v1642, 4
    %v1853 = vperm.slane %v1643, 4
    %v1854 = vperm.slane %v1644, 4
    %v1855 = vperm.slane %v1645, 4
    %v1856 = vperm.slane %v1646, 4
    %v1857 = vperm.slane %v1647, 4
    %v1858 = vperm.slane %v1648, 4
    %v1859 = vperm.slane %v1649, 4
    %v1860 = vperm.slane %v1650, 4
    %v1861 = vperm.slane %v1651, 4
    %v1862 = vperm.slane %v1652, 4
    %v1863 = vperm.slane %v1653, 4
    %v1864 = vperm.slane %v1654, 4
    %v1865 = vperm.slane %v1655, 4
    %v1866 = vmul.f32 %v1850, %v1247
    %v1867 = vmul.f32 %v1851, %v1273
    %v1868 = vmul.f32 %v1852, %v1299
    %v1869 = vmul.f32 %v1853, %v1325
    %v1870 = vmul.f32 %v1854, %v1351
    %v1871 = vmul.f32 %v1855, %v1377
    %v1872 = vmul.f32 %v1856, %v1403
    %v1873 = vmul.f32 %v1857, %v1429
    %v1874 = vmul.f32 %v1858, %v1455
    %v1875 = vmul.f32 %v1859, %v1481
    %v1876 = vmul.f32 %v1860, %v1507
    %v1877 = vmul.f32 %v1861, %v1533
    %v1878 = vmul.f32 %v1862, %v1559
    %v1879 = vmul.f32 %v1863, %v1585
    %v1880 = vmul.f32 %v1864, %v1611
    %v1881 = vmul.f32 %v1865, %v1637
    %v1882 = vperm.slane %v1640, 5
    %v1883 = vperm.slane %v1641, 5
    %v1884 = vperm.slane %v1642, 5
    %v1885 = vperm.slane %v1643, 5
    %v1886 = vperm.slane %v1644, 5
    %v1887 = vperm.slane %v1645, 5
    %v1888 = vperm.slane %v1646, 5
    %v1889 = vperm.slane %v1647, 5
    %v1890 = vperm.slane %v1648, 5
    %v1891 = vperm.slane %v1649, 5
    %v1892 = vperm.slane %v1650, 5
    %v1893 = vperm.slane %v1651, 5
    %v1894 = vperm.slane %v1652, 5
    %v1895 = vperm.slane %v1653, 5
    %v1896 = vperm.slane %v1654, 5
    %v1897 = vperm.slane %v1655, 5
    %v1898 = vmul.f32 %v1882, %v1834
    %v1899 = vmul.f32 %v1883, %v1835
    %v1900 = vmul.f32 %v1884, %v1836
    %v1901 = vmul.f32 %v1885, %v1837
    %v1902 = vmul.f32 %v1886, %v1838
    %v1903 = vmul.f32 %v1887, %v1839
    %v1904 = vmul.f32 %v1888, %v1840
    %v1905 = vmul.f32 %v1889, %v1841
    %v1906 = vmul.f32 %v1890, %v1842
    %v1907 = vmul.f32 %v1891, %v1843
    %v1908 = vmul.f32 %v1892, %v1844
    %v1909 = vmul.f32 %v1893, %v1845
    %v1910 = vmul.f32 %v1894, %v1846
    %v1911 = vmul.f32 %v1895, %v1847
    %v1912 = vmul.f32 %v1896, %v1848
    %v1913 = vmul.f32 %v1897, %v1849
    %v1930 = vrot.slane %v1898, 4
    %v1931 = vrot.slane %v1899, 4
    %v1932 = vrot.slane %v1900, 4
    %v1933 = vrot.slane %v1901, 4
    %v1934 = vrot.slane %v1902, 4
    %v1935 = vrot.slane %v1903, 4
    %v1936 = vrot.slane %v1904, 4
    %v1937 = vrot.slane %v1905, 4
    %v1938 = vrot.slane %v1906, 4
    %v1939 = vrot.slane %v1907, 4
    %v1940 = vrot.slane %v1908, 4
    %v1941 = vrot.slane %v1909, 4
    %v1942 = vrot.slane %v1910, 4
    %v1943 = vrot.slane %v1911, 4
    %v1944 = vrot.slane %v1912, 4
    %v1945 = vrot.slane %v1913, 4
    %v1962 = vadd.f32 %v1866, %v1930
    %v1963 = vadd.f32 %v1867, %v1931
    %v1964 = vadd.f32 %v1868, %v1932
    %v1965 = vadd.f32 %v1869, %v1933
    %v1966 = vadd.f32 %v1870, %v1934
    %v1967 = vadd.f32 %v1871, %v1935
    %v1968 = vadd.f32 %v1872, %v1936
    %v1969 = vadd.f32 %v1873, %v1937
    %v1970 = vadd.f32 %v1874, %v1938
    %v1971 = vadd.f32 %v1875, %v1939
    %v1972 = vadd.f32 %v1876, %v1940
    %v1973 = vadd.f32 %v1877, %v1941
    %v1974 = vadd.f32 %v1878, %v1942
    %v1975 = vadd.f32 %v1879, %v1943
    %v1976 = vadd.f32 %v1880, %v1944
    %v1977 = vadd.f32 %v1881, %v1945
    %v1978 = vld [vmem:[%s5] sm:$0xf]
    %1980 = vset.pattern.permute.xlu0 0
    %1981 = vperm.xlu0 %1980, %v1978
    %v1982 = vpop.permute.xlu0 %1981
    %v1983 = vrot.slane %v1982, 4
    %v1985 = vadd.f32 %v1962, %v1983
    %v1986 = vadd.f32 %v1963, %v1983
    %v1987 = vadd.f32 %v1964, %v1983
    %v1988 = vadd.f32 %v1965, %v1983
    %v1989 = vadd.f32 %v1966, %v1983
    %v1990 = vadd.f32 %v1967, %v1983
    %v1991 = vadd.f32 %v1968, %v1983
    %v1992 = vadd.f32 %v1969, %v1983
    %v1993 = vadd.f32 %v1970, %v1983
    %v1994 = vadd.f32 %v1971, %v1983
    %v1995 = vadd.f32 %v1972, %v1983
    %v1996 = vadd.f32 %v1973, %v1983
    %v1997 = vadd.f32 %v1974, %v1983
    %v1998 = vadd.f32 %v1975, %v1983
    %v1999 = vadd.f32 %v1976, %v1983
    %v2000 = vadd.f32 %v1977, %v1983
    %v2017 = vrot.slane %v1640, 4
    %v2018 = vrot.slane %v1641, 4
    %v2019 = vrot.slane %v1642, 4
    %v2020 = vrot.slane %v1643, 4
    %v2021 = vrot.slane %v1644, 4
    %v2022 = vrot.slane %v1645, 4
    %v2023 = vrot.slane %v1646, 4
    %v2024 = vrot.slane %v1647, 4
    %v2025 = vrot.slane %v1648, 4
    %v2026 = vrot.slane %v1649, 4
    %v2027 = vrot.slane %v1650, 4
    %v2028 = vrot.slane %v1651, 4
    %v2029 = vrot.slane %v1652, 4
    %v2030 = vrot.slane %v1653, 4
    %v2031 = vrot.slane %v1654, 4
    %v2032 = vrot.slane %v1655, 4
    %v2049 = vsub.f32 %v1985, %v2017
    %v2050 = vsub.f32 %v1986, %v2018
    %v2051 = vsub.f32 %v1987, %v2019
    %v2052 = vsub.f32 %v1988, %v2020
    %v2053 = vsub.f32 %v1989, %v2021
    %v2054 = vsub.f32 %v1990, %v2022
    %v2055 = vsub.f32 %v1991, %v2023
    %v2056 = vsub.f32 %v1992, %v2024
    %v2057 = vsub.f32 %v1993, %v2025
    %v2058 = vsub.f32 %v1994, %v2026
    %v2059 = vsub.f32 %v1995, %v2027
    %v2060 = vsub.f32 %v1996, %v2028
    %v2061 = vsub.f32 %v1997, %v2029
    %v2062 = vsub.f32 %v1998, %v2030
    %v2063 = vsub.f32 %v1999, %v2031
    %v2064 = vsub.f32 %v2000, %v2032
    %v2065 = vperm.slane %v1640, 6
    %v2066 = vperm.slane %v1641, 6
    %v2067 = vperm.slane %v1642, 6
    %v2068 = vperm.slane %v1643, 6
    %v2069 = vperm.slane %v1644, 6
    %v2070 = vperm.slane %v1645, 6
    %v2071 = vperm.slane %v1646, 6
    %v2072 = vperm.slane %v1647, 6
    %v2073 = vperm.slane %v1648, 6
    %v2074 = vperm.slane %v1649, 6
    %v2075 = vperm.slane %v1650, 6
    %v2076 = vperm.slane %v1651, 6
    %v2077 = vperm.slane %v1652, 6
    %v2078 = vperm.slane %v1653, 6
    %v2079 = vperm.slane %v1654, 6
    %v2080 = vperm.slane %v1655, 6
    %v2081 = vmul.f32 %v2065, %v2049
    %v2082 = vmul.f32 %v2066, %v2050
    %v2083 = vmul.f32 %v2067, %v2051
    %v2084 = vmul.f32 %v2068, %v2052
    %v2085 = vmul.f32 %v2069, %v2053
    %v2086 = vmul.f32 %v2070, %v2054
    %v2087 = vmul.f32 %v2071, %v2055
    %v2088 = vmul.f32 %v2072, %v2056
    %v2089 = vmul.f32 %v2073, %v2057
    %v2090 = vmul.f32 %v2074, %v2058
    %v2091 = vmul.f32 %v2075, %v2059
    %v2092 = vmul.f32 %v2076, %v2060
    %v2093 = vmul.f32 %v2077, %v2061
    %v2094 = vmul.f32 %v2078, %v2062
    %v2095 = vmul.f32 %v2079, %v2063
    %v2096 = vmul.f32 %v2080, %v2064
    %vm2097 = vweird.f32 %v2081
    %vm2098 = vweird.f32 %v2082
    %vm2099 = vweird.f32 %v2083
    %vm2100 = vweird.f32 %v2084
    %vm2101 = vweird.f32 %v2085
    %vm2102 = vweird.f32 %v2086
    %vm2103 = vweird.f32 %v2087
    %vm2104 = vweird.f32 %v2088
    %vm2105 = vweird.f32 %v2089
    %vm2106 = vweird.f32 %v2090
    %vm2107 = vweird.f32 %v2091
    %vm2108 = vweird.f32 %v2092
    %vm2109 = vweird.f32 %v2093
    %vm2110 = vweird.f32 %v2094
    %vm2111 = vweird.f32 %v2095
    %vm2112 = vweird.f32 %v2096
    %vm2113 = vmxor %vm2097, 1
    %vm2114 = vmxor %vm2098, 1
    %vm2115 = vmxor %vm2099, 1
    %vm2116 = vmxor %vm2100, 1
    %vm2117 = vmxor %vm2101, 1
    %vm2118 = vmxor %vm2102, 1
    %vm2119 = vmxor %vm2103, 1
    %vm2120 = vmxor %vm2104, 1
    %vm2121 = vmxor %vm2105, 1
    %vm2122 = vmxor %vm2106, 1
    %vm2123 = vmxor %vm2107, 1
    %vm2124 = vmxor %vm2108, 1
    %vm2125 = vmxor %vm2109, 1
    %vm2126 = vmxor %vm2110, 1
    %vm2127 = vmxor %vm2111, 1
    %vm2128 = vmxor %vm2112, 1
    %v2129 = vsel %vm2113, %v2081, 0.0
    %v2130 = vsel %vm2114, %v2082, 0.0
    %v2131 = vsel %vm2115, %v2083, 0.0
    %v2132 = vsel %vm2116, %v2084, 0.0
    %v2133 = vsel %vm2117, %v2085, 0.0
    %v2134 = vsel %vm2118, %v2086, 0.0
    %v2135 = vsel %vm2119, %v2087, 0.0
    %v2136 = vsel %vm2120, %v2088, 0.0
    %v2137 = vsel %vm2121, %v2089, 0.0
    %v2138 = vsel %vm2122, %v2090, 0.0
    %v2139 = vsel %vm2123, %v2091, 0.0
    %v2140 = vsel %vm2124, %v2092, 0.0
    %v2141 = vsel %vm2125, %v2093, 0.0
    %v2142 = vsel %vm2126, %v2094, 0.0
    %v2143 = vsel %vm2127, %v2095, 0.0
    %v2144 = vsel %vm2128, %v2096, 0.0
    %v2161 = vrot.slane %v1247, 4
    %v2162 = vrot.slane %v1273, 4
    %v2163 = vrot.slane %v1299, 4
    %v2164 = vrot.slane %v1325, 4
    %v2165 = vrot.slane %v1351, 4
    %v2166 = vrot.slane %v1377, 4
    %v2167 = vrot.slane %v1403, 4
    %v2168 = vrot.slane %v1429, 4
    %v2169 = vrot.slane %v1455, 4
    %v2170 = vrot.slane %v1481, 4
    %v2171 = vrot.slane %v1507, 4
    %v2172 = vrot.slane %v1533, 4
    %v2173 = vrot.slane %v1559, 4
    %v2174 = vrot.slane %v1585, 4
    %v2175 = vrot.slane %v1611, 4
    %v2176 = vrot.slane %v1637, 4
    %v2193 = vmul.f32 %v2129, %v2161
    %v2194 = vmul.f32 %v2130, %v2162
    %v2195 = vmul.f32 %v2131, %v2163
    %v2196 = vmul.f32 %v2132, %v2164
    %v2197 = vmul.f32 %v2133, %v2165
    %v2198 = vmul.f32 %v2134, %v2166
    %v2199 = vmul.f32 %v2135, %v2167
    %v2200 = vmul.f32 %v2136, %v2168
    %v2201 = vmul.f32 %v2137, %v2169
    %v2202 = vmul.f32 %v2138, %v2170
    %v2203 = vmul.f32 %v2139, %v2171
    %v2204 = vmul.f32 %v2140, %v2172
    %v2205 = vmul.f32 %v2141, %v2173
    %v2206 = vmul.f32 %v2142, %v2174
    %v2207 = vmul.f32 %v2143, %v2175
    %v2208 = vmul.f32 %v2144, %v2176
    %2225 = vst.sshfl [vmem:[#allocation1] sm:$0xff pattern:$0x75316420] %v2193
    %2226 = vst.sshfl [vmem:[#allocation1 + $0x8] sm:$0xff pattern:$0x75316420] %v2194
    %2227 = vst.sshfl [vmem:[#allocation1 + $0x10] sm:$0xff pattern:$0x75316420] %v2195
    %2228 = vst.sshfl [vmem:[#allocation1 + $0x18] sm:$0xff pattern:$0x75316420] %v2196
    %2229 = vst.sshfl [vmem:[#allocation1 + $0x20] sm:$0xff pattern:$0x75316420] %v2197
    %2230 = vst.sshfl [vmem:[#allocation1 + $0x28] sm:$0xff pattern:$0x75316420] %v2198
    %2231 = vst.sshfl [vmem:[#allocation1 + $0x30] sm:$0xff pattern:$0x75316420] %v2199
    %2232 = vst.sshfl [vmem:[#allocation1 + $0x38] sm:$0xff pattern:$0x75316420] %v2200
    %s2233 = scalar_lea.vmem [#allocation1], 1
    %v2234 = vld [vmem:[%s2233] ss:$2 sm:$0xff]
    %s2235 = scalar_lea.vmem [#allocation1], 17
    %v2236 = vld [vmem:[%s2235] ss:$2 sm:$0xff]
    %s2237 = scalar_lea.vmem [#allocation1], 33
    %v2238 = vld [vmem:[%s2237] ss:$2 sm:$0xff]
    %s2239 = scalar_lea.vmem [#allocation1], 49
    %v2240 = vld [vmem:[%s2239] ss:$2 sm:$0xff]
    %2241 = vst.sshfl [vmem:[#allocation1] sm:$0xff pattern:$0x75316420] %v2201
    %2242 = vst.sshfl [vmem:[#allocation1 + $0x8] sm:$0xff pattern:$0x75316420] %v2202
    %2243 = vst.sshfl [vmem:[#allocation1 + $0x10] sm:$0xff pattern:$0x75316420] %v2203
    %2244 = vst.sshfl [vmem:[#allocation1 + $0x18] sm:$0xff pattern:$0x75316420] %v2204
    %2245 = vst.sshfl [vmem:[#allocation1 + $0x20] sm:$0xff pattern:$0x75316420] %v2205
    %2246 = vst.sshfl [vmem:[#allocation1 + $0x28] sm:$0xff pattern:$0x75316420] %v2206
    %2247 = vst.sshfl [vmem:[#allocation1 + $0x30] sm:$0xff pattern:$0x75316420] %v2207
    %2248 = vst.sshfl [vmem:[#allocation1 + $0x38] sm:$0xff pattern:$0x75316420] %v2208
    %v2249 = vld [vmem:[%s2233] ss:$2 sm:$0xff]
    %v2250 = vld [vmem:[%s2235] ss:$2 sm:$0xff]
    %v2251 = vld [vmem:[%s2237] ss:$2 sm:$0xff]
    %v2252 = vld [vmem:[%s2239] ss:$2 sm:$0xff]
    %2261 = vst [vmem:[#allocation7] sm:$0xff] %v2234
    %2262 = vst [vmem:[#allocation7 + $0x8] sm:$0xff] %v2236
    %2263 = vst [vmem:[#allocation7 + $0x10] sm:$0xff] %v2238
    %2264 = vst [vmem:[#allocation7 + $0x18] sm:$0xff] %v2240
    %2265 = vst [vmem:[#allocation7 + $0x20] sm:$0xff] %v2249
    %2266 = vst [vmem:[#allocation7 + $0x28] sm:$0xff] %v2250
    %2267 = vst [vmem:[#allocation7 + $0x30] sm:$0xff] %v2251
    %2268 = vst [vmem:[#allocation7 + $0x38] sm:$0xff] %v2252
    // Predicated region
    $region34: #{tpu_custom_call.1} parent=1 // pred_check
      _
    $region35: #{tpu_custom_call.1} parent=1 // pred_check_branch
      %2270 = sbr.rel (0) target = $region37
    $region36: #{tpu_custom_call.1} parent=1 // pred_region
      %2272 = vsyncadd [#allocation4], 0
      %s2274 = sshll.u32 [#allocation7], 4
      %s2275 = int_to_ptr.vmem [resolvable:$true] %s2274
      %s2276 = sshll.u32 %s6, 4
      %s2277 = int_to_ptr.hbm [resolvable:$true] %s2276
      %2279 = dma.vmem_to_hbm [thread:$0]  %s2275, 1024, %s2277, [#allocation4]
    $region37: #{tpu_custom_call.1} parent=1 // pred_fallthru
      _
    // Predicated region
    $region38: #{tpu_custom_call.1} parent=1 // pred_check
      _
    $region39: #{tpu_custom_call.1} parent=1 // pred_check_branch
      %2281 = sbr.rel (0) target = $region41
    $region40: #{tpu_custom_call.1} parent=1 // pred_region
      %2283 = dma.done [#allocation4], 1024
    $region41: #{tpu_custom_call.1} parent=1 // pred_fallthru
      _
    %2284 = vsyncpa [#allocation3], 1
    %2285 = vsyncpa [#allocation6], 1
    %2286 = vsyncpa [#allocation4], 1

</llo_original>
